<compile_context>
chip_gen: v7x
topology: tpu7x:2x2x1
jax: 0.10.0
libtpu: 0.0.40
codegen_flags: <defaults>
</compile_context>

<pallas_src>
import math
import jax
import jax.numpy as jnp
from jax import lax
from jax.experimental import pallas as pl
from jax.experimental.pallas import tpu as pltpu


_LOG_2PI = math.log(2.0 * math.pi)
_INV_SQRT_2PI = 1.0 / math.sqrt(2.0 * math.pi)
_INV_SQRT_PI = 1.0 / math.sqrt(math.pi)
_INV_SQRT_2 = 1.0 / math.sqrt(2.0)

_VMEM_LIMIT = 32 * 1024 * 1024  # safe explicit scoped-VMEM budget on v5e/v6e/v7x


def _round_up(a, b):
    return (a + b - 1) // b * b


# ----------------------------------------------------------------------------
# In-kernel math helpers (only ops with guaranteed Mosaic lowerings)
# ----------------------------------------------------------------------------
def _sigmoid(x):
    return 1.0 / (1.0 + jnp.exp(-x))


def _softplus(x):
    return jnp.maximum(x, 0.0) + jnp.log(1.0 + jnp.exp(-jnp.abs(x)))


def _erf_from_exp(u, exp_neg_u2):
    # Abramowitz & Stegun 7.1.26, |err| <= 1.5e-7.  exp(-u^2) supplied by caller
    # (reused from the Gaussian pdf term -> one fewer EUP exp).
    t = 1.0 / (1.0 + 0.3275911 * jnp.abs(u))
    poly = ((((1.061405429 * t - 1.453152027) * t + 1.421413741) * t
             - 0.284496736) * t + 0.254829592) * t
    val = 1.0 - poly * exp_neg_u2
    return jnp.where(u >= 0.0, val, -val)


def _apply_mlp(h, w_refs, b_refs, relu_mask):
    for w, b, r in zip(w_refs, b_refs, relu_mask):
        h = jnp.dot(h, w[...], preferred_element_type=jnp.float32) + b[...]
        if r:
            h = jnp.maximum(h, 0.0)
    return h


# ----------------------------------------------------------------------------
# Fused encoder kernel: fused layer-0 of both pre-nets (shared input, 2H wide),
# remaining pre-net layers, per-batch mean pool (pooling matmul), post nets,
# reparameterized z, and the encoded-half of decoder layer 0.  Grid: (B_pad/TB,)
# ----------------------------------------------------------------------------
def _make_encoder_kernel(n_pre_rest, n_post, relu_pre, relu_post, H, L):
    def kernel(inp_ref, eps_ref, pool_ref, *refs):
        idx = 0

        def take(k):
            nonlocal idx
            out = refs[idx:idx + k]
            idx += k
            return out

        (w_pre0,) = take(1)
        (b_pre0,) = take(1)
        dpw = take(n_pre_rest)
        dpb = take(n_pre_rest)
        lpw = take(n_pre_rest)
        lpb = take(n_pre_rest)
        dqw = take(n_post)
        dqb = take(n_post)
        lqw = take(n_post)
        lqb = take(n_post)
        (w0t,) = take(1)
        (w0z,) = take(1)
        (b0,) = take(1)
        out_ref = refs[idx]

        inp = inp_ref[...]                                   # [TB*Nc, din]

        # fused layer 0 of denc_pre and lenc_pre: [din, 2H] weight, one matmul
        h = jnp.dot(inp, w_pre0[...],
                    preferred_element_type=jnp.float32) + b_pre0[...]   # [M, 2H]
        if relu_pre[0]:
            h = jnp.maximum(h, 0.0)
        hd = h[:, :H]                                        # denc path
        hl = h[:, H:]                                        # lenc path

        hd = _apply_mlp(hd, dpw, dpb, relu_pre[1:])          # [M, H]
        hl = _apply_mlp(hl, lpw, lpb, relu_pre[1:])          # [M, H]

        # per-batch mean pooling as a small pooling matmul (no in-kernel reshape)
        pool = pool_ref[...]                                 # [TB, TB*Nc]
        hd = jnp.dot(pool, hd, preferred_element_type=jnp.float32)   # [TB, H]
        hl = jnp.dot(pool, hl, preferred_element_type=jnp.float32)   # [TB, H]

        theta = _apply_mlp(hd, dqw, dqb, relu_post)          # [TB, H]
        post = _apply_mlp(hl, lqw, lqb, relu_post)           # [TB, 2L]
        mu_z = post[:, :L]
        sigma_z = 0.1 + 0.9 * _sigmoid(post[:, L:])
        z = mu_z + sigma_z * eps_ref[...]                    # rsample(), [TB, L]

        # encoded = cat([theta, z]); decoder layer-0 projection of the encoded part
        e_proj = (jnp.dot(theta, w0t[...], preferred_element_type=jnp.float32)
                  + jnp.dot(z, w0z[...], preferred_element_type=jnp.float32)
                  + b0[...])                                  # [TB, H]
        out_ref[...] = e_proj
    return kernel


def _encoder_forward(params, inp_flat, eps, pool, w0t, w0z, b0, TB, B_pad, Nc):
    H = params["dim_hid"]
    L = params["dim_lat"]
    dpw, dpb = params["denc_pre_w"], params["denc_pre_b"]
    lpw, lpb = params["lenc_pre_w"], params["lenc_pre_b"]
    dqw, dqb = params["denc_post_w"], params["denc_post_b"]
    lqw, lqb = params["lenc_post_w"], params["lenc_post_b"]

    # fuse layer-0 of both pre-nets (shared input): [din, 2H] / [1, 2H]
    w_pre0 = jnp.concatenate([dpw[0], lpw[0]], axis=1)
    b_pre0 = jnp.concatenate([dpb[0], lpb[0]], axis=1)

    weights = ([w_pre0, b_pre0]
               + list(dpw[1:]) + list(dpb[1:])
               + list(lpw[1:]) + list(lpb[1:])
               + list(dqw) + list(dqb) + list(lqw) + list(lqb)
               + [w0t, w0z, b0])

    din = inp_flat.shape[-1]
    M = TB * Nc
    NB = B_pad // TB

    def wspec(a):  # weights / biases stay VMEM-resident (constant index map)
        return pl.BlockSpec(a.shape, lambda i: (0, 0))

    kernel = _make_encoder_kernel(len(dpw) - 1, len(dqw),
                                  params["relu_pre"], params["relu_post"], H, L)

    return pl.pallas_call(
        kernel,
        out_shape=jax.ShapeDtypeStruct((B_pad, H), jnp.float32),
        grid=(NB,),
        in_specs=[pl.BlockSpec((M, din), lambda i: (i, 0)),
                  pl.BlockSpec((TB, L), lambda i: (i, 0)),
                  pl.BlockSpec((TB, M), lambda i: (0, 0))]
                 + [wspec(a) for a in weights],
        out_specs=pl.BlockSpec((TB, H), lambda i: (i, 0)),
        compiler_params=pltpu.CompilerParams(
            dimension_semantics=("parallel",),
            vmem_limit_bytes=_VMEM_LIMIT),
    )(inp_flat, eps, pool, *weights)


# ----------------------------------------------------------------------------
# Fused decoder + heads + metrics kernel with in-kernel masked reduction.
# Grid: (B, N_pad // TN) -> output [B, 1, 5] partial sums
#   lanes: 0 ctx_ll_sum, 1 tar_ll_sum, 2 ctx_re_sum, 3 tar_re_sum, 4 tar_crps_sum
# ----------------------------------------------------------------------------
def _make_decoder_kernel(n_rest, relu0, relu_rest, dx, dy, TN, Nc, N):
    def kernel(x_ref, y_ref, eproj_ref, w0x_ref, *refs):
        ws = refs[:n_rest]
        bs = refs[n_rest:2 * n_rest]
        met_ref = refs[2 * n_rest]
        j = pl.program_id(1)

        xb = x_ref[0]                                        # [TN, dx]
        e_row = eproj_ref[0]                                 # [1, H] (encoded@W0_e + b0)

        # decoder layer 0, x-part: dx is tiny -> broadcast-multiply instead of matmul
        if dx <= 8:
            w0x = w0x_ref[...]                               # [dx, H]
            h = xb[:, 0:1] * w0x[0:1, :]
            for d in range(1, dx):
                h = h + xb[:, d:d + 1] * w0x[d:d + 1, :]
        else:
            h = jnp.dot(xb, w0x_ref[...], preferred_element_type=jnp.float32)
        h = h + e_row                                        # add per-batch encoded row
        if relu0:
            h = jnp.maximum(h, 0.0)

        for w, b, r in zip(ws, bs, relu_rest):               # remaining decoder layers
            h = jnp.dot(h, w[...], preferred_element_type=jnp.float32) + b[...]
            if r:
                h = jnp.maximum(h, 0.0)

        mu = h[:, :dy]                                       # [TN, dy]
        sigma = 0.1 + 0.9 * _softplus(h[:, dy:])             # [TN, dy]

        # fused metrics epilogue (all f32)
        yb = y_ref[0]                                        # [TN, dy]
        sig_c = jnp.maximum(sigma, 1e-8)                     # CRPS clamp (sigma >= 0.1)
        zz = (yb - mu) / sig_c                               # == (y-mu)/sigma here
        zz2 = zz * zz
        e_half = jnp.exp(-0.5 * zz2)                         # exp(-z^2/2), reused below
        logp = (-0.5 * _LOG_2PI) - jnp.log(sigma) - 0.5 * zz2
        pdf = e_half * _INV_SQRT_2PI
        cdf = 0.5 * (1.0 + _erf_from_exp(zz * _INV_SQRT_2, e_half))
        crps = sig_c * (zz * (2.0 * cdf - 1.0) + 2.0 * pdf - _INV_SQRT_PI)
        rel = jnp.abs(mu - yb) / jnp.abs(yb)                 # matches torch (no eps)

        if dy == 1:                                          # skip identity reductions
            ll_row, re_row, cr_row = logp, rel, crps         # [TN, 1]
        else:
            ll_row = jnp.sum(logp, axis=-1, keepdims=True)
            re_row = jnp.mean(rel, axis=-1, keepdims=True)
            cr_row = jnp.sum(crps, axis=-1, keepdims=True)

        # ctx / tar / padding masks from global row index
        row_idx = lax.broadcasted_iota(jnp.int32, (TN, 1), 0) + j * TN
        ctx_m = row_idx < Nc
        tar_m = jnp.logical_and(row_idx >= Nc, row_idx < N)

        s = jnp.concatenate([
            jnp.sum(jnp.where(ctx_m, ll_row, 0.0), keepdims=True),
            jnp.sum(jnp.where(tar_m, ll_row, 0.0), keepdims=True),
            jnp.sum(jnp.where(ctx_m, re_row, 0.0), keepdims=True),
            jnp.sum(jnp.where(tar_m, re_row, 0.0), keepdims=True),
            jnp.sum(jnp.where(tar_m, cr_row, 0.0), keepdims=True),
        ], axis=-1)                                          # [1, 5]

        @pl.when(j == 0)
        def _():
            met_ref[...] = jnp.zeros_like(met_ref)
        met_ref[0] = met_ref[0] + s
    return kernel


def _decoder_forward(params, x_p, y_p, e_proj3, w0x, TN, Nc, N):
    B, N_pad, dx = x_p.shape
    dy = y_p.shape[-1]
    H = params["dim_hid"]

    dw = list(params["dec_w"][1:])
    db = list(params["dec_b"][1:])
    relu0 = params["relu_dec"][0]
    relu_rest = tuple(params["relu_dec"][1:])
    NT = N_pad // TN
    weights = dw + db

    def wspec(a):
        return pl.BlockSpec(a.shape, lambda b, j: (0, 0))

    kernel = _make_decoder_kernel(len(dw), relu0, relu_rest, dx, dy, TN, Nc, N)

    return pl.pallas_call(
        kernel,
        out_shape=jax.ShapeDtypeStruct((B, 1, 5), jnp.float32),
        grid=(B, NT),
        in_specs=[pl.BlockSpec((1, TN, dx), lambda b, j: (b, j, 0)),
                  pl.BlockSpec((1, TN, dy), lambda b, j: (b, j, 0)),
                  pl.BlockSpec((1, 1, H), lambda b, j: (b, 0, 0)),
                  wspec(w0x)] + [wspec(a) for a in weights],
        out_specs=pl.BlockSpec((1, 1, 5), lambda b, j: (b, 0, 0)),
        compiler_params=pltpu.CompilerParams(
            dimension_semantics=("parallel", "arbitrary"),
            vmem_limit_bytes=_VMEM_LIMIT),
    )(x_p, y_p, e_proj3, w0x, *weights)


# ----------------------------------------------------------------------------
# Deterministic parameter init (mimics torch.nn.Linear default uniform init)
# ----------------------------------------------------------------------------
def _init_linear(key, fan_in, fan_out):
    kw, kb = jax.random.split(key)
    bound = 1.0 / math.sqrt(fan_in)
    w = jax.random.uniform(kw, (fan_in, fan_out), jnp.float32, -bound, bound)
    b = jax.random.uniform(kb, (1, fan_out), jnp.float32, -bound, bound)
    return w, b


def _init_mlp(key, dims):
    ws, bs = [], []
    keys = jax.random.split(key, len(dims) - 1)
    for k, din, dout in zip(keys, dims[:-1], dims[1:]):
        w, b = _init_linear(k, din, dout)
        ws.append(w)
        bs.append(b)
    return ws, bs


def init_np_params(key, dim_x, dim_y, dim_hid, dim_lat,
                   enc_pre_depth=4, enc_post_depth=2, dec_depth=3):
    k = jax.random.split(key, 5)
    din = dim_x + dim_y
    pre_dims = [din] + [dim_hid] * (enc_pre_depth - 1) + [dim_hid]
    denc_post_dims = [dim_hid] * enc_post_depth + [dim_hid]
    lenc_post_dims = [dim_hid] * enc_post_depth + [2 * dim_lat]
    # decoder input ordering = [encoded(dim_hid+dim_lat), x(dim_x)] (cat([encoded, x]))
    dec_dims = [dim_hid + dim_lat + dim_x] + [dim_hid] * (dec_depth - 1) + [2 * dim_y]

    params = {}
    params["denc_pre_w"], params["denc_pre_b"] = _init_mlp(k[0], pre_dims)
    params["denc_post_w"], params["denc_post_b"] = _init_mlp(k[1], denc_post_dims)
    params["lenc_pre_w"], params["lenc_pre_b"] = _init_mlp(k[2], pre_dims)
    params["lenc_post_w"], params["lenc_post_b"] = _init_mlp(k[3], lenc_post_dims)
    params["dec_w"], params["dec_b"] = _init_mlp(k[4], dec_dims)
    params["relu_pre"] = (True,) * (enc_pre_depth - 1) + (False,)
    params["relu_post"] = (True,) * (enc_post_depth - 1) + (False,)
    params["relu_dec"] = (True,) * (dec_depth - 1) + (False,)
    params["dim_hid"] = dim_hid
    params["dim_lat"] = dim_lat
    return params


# ----------------------------------------------------------------------------
# NP forward (eval branch: num_samples=None, reduce_ll=True)
#   eps: [B, dim_lat] standard-normal noise for the reparameterized z sample.
# ----------------------------------------------------------------------------
def np_forward_eval(params, xc, yc, x, y, eps):
    B, Nc, dx = xc.shape
    _, N, _ = x.shape
    dy = yc.shape[-1]
    H = params["dim_hid"]
    L = params["dim_lat"]

    # ---- encoder: batch-block over B ----
    TB = B if B <= 8 else 8
    B_pad = _round_up(B, TB)
    inp_c = jnp.concatenate([xc, yc], axis=-1)               # [B, Nc, dx+dy]
    eps_p = eps
    if B_pad != B:
        inp_c = jnp.pad(inp_c, ((0, B_pad - B), (0, 0), (0, 0)))
        eps_p = jnp.pad(eps, ((0, B_pad - B), (0, 0)))
    inp_flat = inp_c.reshape(B_pad * Nc, dx + dy)            # host-side (free) reshape
    pool = (jnp.kron(jnp.eye(TB, dtype=jnp.float32),
                     jnp.ones((1, Nc), jnp.float32)) / float(Nc))   # [TB, TB*Nc]

    # split decoder layer-0 weight: theta-part / z-part (precomputed) / x-part
    w0 = params["dec_w"][0]                                  # [(H+L)+dx, H]
    b0 = params["dec_b"][0]
    w0t, w0z, w0x = w0[:H], w0[H:H + L], w0[H + L:]

    e_proj = _encoder_forward(params, inp_flat, eps_p, pool, w0t, w0z, b0,
                              TB, B_pad, Nc)                 # [B_pad, H]
    e_proj3 = e_proj.reshape(B_pad, 1, H)

    # ---- decoder: 128-aligned row tiles ----
    N_pad = _round_up(N, 128)
    if N_pad <= 512:
        TN = N_pad
    elif N_pad % 512 == 0:
        TN = 512
    elif N_pad % 256 == 0:
        TN = 256
    else:
        TN = 128
    if N_pad != N:
        x_p = jnp.pad(x, ((0, 0), (0, N_pad - N), (0, 0)))
        y_p = jnp.pad(y, ((0, 0), (0, N_pad - N), (0, 0)), constant_values=1.0)
    else:
        x_p, y_p = x, y

    sums = _decoder_forward(params, x_p, y_p, e_proj3, w0x, TN, Nc, N)   # [B, 1, 5]
    s = jnp.sum(sums[:, 0, :], axis=0)                        # [5]
    n_ctx = float(B * Nc)
    n_tar = float(B * (N - Nc))
    return {
        "crps": s[4] / (n_tar * dy),
        "ctx_ll": s[0] / n_ctx,
        "tar_ll": s[1] / n_tar,
        "ctx_re": s[2] / n_ctx,
        "tar_re": s[3] / n_tar,
    }


# ----------------------------------------------------------------------------
# Pure-JAX reference (mirrors the torch module's eval branch) for verification
# ----------------------------------------------------------------------------
def _mlp_ref(h, ws, bs, relus):
    for w, b, r in zip(ws, bs, relus):
        h = jnp.dot(h, w, precision=lax.Precision.HIGHEST) + b
        if r:
            h = jnp.maximum(h, 0.0)
    return h


def np_forward_eval_ref(params, xc, yc, x, y, eps):
    B, Nc, _ = xc.shape
    N = x.shape[1]
    dy = y.shape[-1]
    H, L = params["dim_hid"], params["dim_lat"]
    inp = jnp.concatenate([xc, yc], axis=-1)
    hd = _mlp_ref(inp, params["denc_pre_w"], params["denc_pre_b"],
                  params["relu_pre"]).mean(1)
    theta = _mlp_ref(hd, params["denc_post_w"], params["denc_post_b"],
                     params["relu_post"])
    hl = _mlp_ref(inp, params["lenc_pre_w"], params["lenc_pre_b"],
                  params["relu_pre"]).mean(1)
    post = _mlp_ref(hl, params["lenc_post_w"], params["lenc_post_b"],
                    params["relu_post"])
    z = post[:, :L] + (0.1 + 0.9 * jax.nn.sigmoid(post[:, L:])) * eps
    enc = jnp.concatenate([theta, z], axis=-1)
    enc = jnp.broadcast_to(enc[:, None, :], (B, N, H + L))
    out = _mlp_ref(jnp.concatenate([enc, x], axis=-1),
                   params["dec_w"], params["dec_b"], params["relu_dec"])
    mu = out[..., :dy]
    sigma = 0.1 + 0.9 * jax.nn.softplus(out[..., dy:])
    logp = -jnp.log(sigma) - 0.5 * _LOG_2PI - 0.5 * ((y - mu) / sigma) ** 2
    ll = logp.sum(-1)
    rel = (jnp.abs(mu - y) / jnp.abs(y)).mean(-1)
    sig_c = jnp.maximum(sigma, 1e-8)
    zz = (y - mu) / sig_c
    pdf = jnp.exp(-0.5 * zz * zz) * _INV_SQRT_2PI
    cdf = 0.5 * (1.0 + lax.erf(zz * _INV_SQRT_2))
    crps = sig_c * (zz * (2.0 * cdf - 1.0) + 2.0 * pdf - _INV_SQRT_PI)
    return {
        "crps": crps[:, Nc:, :].mean(),
        "ctx_ll": ll[:, :Nc].mean(),
        "tar_ll": ll[:, Nc:].mean(),
        "ctx_re": rel[:, :Nc].mean(),
        "tar_re": rel[:, Nc:].mean(),
    }


# ----------------------------------------------------------------------------
if __name__ == "__main__":
    dim_x, dim_y, dim_hid, dim_lat = 1, 1, 128, 128   # module defaults (lane-aligned)
    B, N, Nc = 2, 12, 4

    key = jax.random.PRNGKey(0)
    kx, ky, kz = jax.random.split(key, 3)
    x = jax.random.uniform(kx, (B, N, dim_x), jnp.float32, -2.0, 2.0)
    y = jnp.sin(x) + 0.1 * jax.random.normal(ky, (B, N, dim_y), jnp.float32)
    xc, yc = x[:, :Nc], y[:, :Nc]

    params = init_np_params(jax.random.PRNGKey(1), dim_x, dim_y, dim_hid, dim_lat)
    eps = jax.random.normal(kz, (B, dim_lat), jnp.float32)   # rsample() noise

    outs = np_forward_eval(params, xc, yc, x, y, eps)
    jax.block_until_ready(outs)

    ref = np_forward_eval_ref(params, xc, yc, x, y, eps)
    for k in sorted(outs):
        a, b = float(outs[k]), float(ref[k])
        if not (abs(a - b) <= 2e-2 + 2e-2 * abs(b)):
            raise RuntimeError(f"metric {k} mismatch: kernel={a} ref={b}")

    print("KERNEL_OK")
</pallas_src>

<mosaic_0001>
module attributes {stable_mosaic.version = 11 : i64} {
  func.func @kernel(%arg0: i32, %arg1: memref<8x2xf32, #tpu.memory_space<vmem>>, %arg2: memref<2x128xf32, #tpu.memory_space<vmem>>, %arg3: memref<2x8xf32, #tpu.memory_space<vmem>>, %arg4: memref<2x256xf32, #tpu.memory_space<vmem>>, %arg5: memref<1x256xf32, #tpu.memory_space<vmem>>, %arg6: memref<128x128xf32, #tpu.memory_space<vmem>>, %arg7: memref<128x128xf32, #tpu.memory_space<vmem>>, %arg8: memref<128x128xf32, #tpu.memory_space<vmem>>, %arg9: memref<1x128xf32, #tpu.memory_space<vmem>>, %arg10: memref<1x128xf32, #tpu.memory_space<vmem>>, %arg11: memref<1x128xf32, #tpu.memory_space<vmem>>, %arg12: memref<128x128xf32, #tpu.memory_space<vmem>>, %arg13: memref<128x128xf32, #tpu.memory_space<vmem>>, %arg14: memref<128x128xf32, #tpu.memory_space<vmem>>, %arg15: memref<1x128xf32, #tpu.memory_space<vmem>>, %arg16: memref<1x128xf32, #tpu.memory_space<vmem>>, %arg17: memref<1x128xf32, #tpu.memory_space<vmem>>, %arg18: memref<128x128xf32, #tpu.memory_space<vmem>>, %arg19: memref<128x128xf32, #tpu.memory_space<vmem>>, %arg20: memref<1x128xf32, #tpu.memory_space<vmem>>, %arg21: memref<1x128xf32, #tpu.memory_space<vmem>>, %arg22: memref<128x128xf32, #tpu.memory_space<vmem>>, %arg23: memref<128x256xf32, #tpu.memory_space<vmem>>, %arg24: memref<1x128xf32, #tpu.memory_space<vmem>>, %arg25: memref<1x256xf32, #tpu.memory_space<vmem>>, %arg26: memref<128x128xf32, #tpu.memory_space<vmem>>, %arg27: memref<128x128xf32, #tpu.memory_space<vmem>>, %arg28: memref<1x128xf32, #tpu.memory_space<vmem>>, %arg29: memref<2x128xf32, #tpu.memory_space<vmem>>) attributes {dimension_semantics = [#tpu.dimension_semantics<parallel>], iteration_bounds = array<i64: 1>, scalar_prefetch = 0 : i64, scratch_operands = 0 : i64, tpu.core_type = #tpu.core_type<tc>, window_params = [{transform_indices = @transform_0, window_bounds = array<i64: 8, 2>}, {transform_indices = @transform_1, window_bounds = array<i64: 2, 128>}, {pipeline_mode = #tpu.pipeline_mode<synchronous>, transform_indices = @transform_2, window_bounds = array<i64: 2, 8>}, {pipeline_mode = #tpu.pipeline_mode<synchronous>, transform_indices = @transform_3, window_bounds = array<i64: 2, 256>}, {pipeline_mode = #tpu.pipeline_mode<synchronous>, transform_indices = @transform_4, window_bounds = array<i64: 1, 256>}, {pipeline_mode = #tpu.pipeline_mode<synchronous>, transform_indices = @transform_5, window_bounds = array<i64: 128, 128>}, {pipeline_mode = #tpu.pipeline_mode<synchronous>, transform_indices = @transform_6, window_bounds = array<i64: 128, 128>}, {pipeline_mode = #tpu.pipeline_mode<synchronous>, transform_indices = @transform_7, window_bounds = array<i64: 128, 128>}, {pipeline_mode = #tpu.pipeline_mode<synchronous>, transform_indices = @transform_8, window_bounds = array<i64: 1, 128>}, {pipeline_mode = #tpu.pipeline_mode<synchronous>, transform_indices = @transform_9, window_bounds = array<i64: 1, 128>}, {pipeline_mode = #tpu.pipeline_mode<synchronous>, transform_indices = @transform_10, window_bounds = array<i64: 1, 128>}, {pipeline_mode = #tpu.pipeline_mode<synchronous>, transform_indices = @transform_11, window_bounds = array<i64: 128, 128>}, {pipeline_mode = #tpu.pipeline_mode<synchronous>, transform_indices = @transform_12, window_bounds = array<i64: 128, 128>}, {pipeline_mode = #tpu.pipeline_mode<synchronous>, transform_indices = @transform_13, window_bounds = array<i64: 128, 128>}, {pipeline_mode = #tpu.pipeline_mode<synchronous>, transform_indices = @transform_14, window_bounds = array<i64: 1, 128>}, {pipeline_mode = #tpu.pipeline_mode<synchronous>, transform_indices = @transform_15, window_bounds = array<i64: 1, 128>}, {pipeline_mode = #tpu.pipeline_mode<synchronous>, transform_indices = @transform_16, window_bounds = array<i64: 1, 128>}, {pipeline_mode = #tpu.pipeline_mode<synchronous>, transform_indices = @transform_17, window_bounds = array<i64: 128, 128>}, {pipeline_mode = #tpu.pipeline_mode<synchronous>, transform_indices = @transform_18, window_bounds = array<i64: 128, 128>}, {pipeline_mode = #tpu.pipeline_mode<synchronous>, transform_indices = @transform_19, window_bounds = array<i64: 1, 128>}, {pipeline_mode = #tpu.pipeline_mode<synchronous>, transform_indices = @transform_20, window_bounds = array<i64: 1, 128>}, {pipeline_mode = #tpu.pipeline_mode<synchronous>, transform_indices = @transform_21, window_bounds = array<i64: 128, 128>}, {pipeline_mode = #tpu.pipeline_mode<synchronous>, transform_indices = @transform_22, window_bounds = array<i64: 128, 256>}, {pipeline_mode = #tpu.pipeline_mode<synchronous>, transform_indices = @transform_23, window_bounds = array<i64: 1, 128>}, {pipeline_mode = #tpu.pipeline_mode<synchronous>, transform_indices = @transform_24, window_bounds = array<i64: 1, 256>}, {pipeline_mode = #tpu.pipeline_mode<synchronous>, transform_indices = @transform_25, window_bounds = array<i64: 128, 128>}, {pipeline_mode = #tpu.pipeline_mode<synchronous>, transform_indices = @transform_26, window_bounds = array<i64: 128, 128>}, {pipeline_mode = #tpu.pipeline_mode<synchronous>, transform_indices = @transform_27, window_bounds = array<i64: 1, 128>}, {transform_indices = @transform_28, window_bounds = array<i64: 2, 128>}]} {
    %c0 = arith.constant 0 : index
    %c0_0 = arith.constant 0 : index
    %0 = vector.load %arg1[%c0, %c0_0] : memref<8x2xf32, #tpu.memory_space<vmem>>, vector<8x2xf32>
    %c0_1 = arith.constant 0 : index
    %c0_2 = arith.constant 0 : index
    %1 = vector.load %arg4[%c0_1, %c0_2] : memref<2x256xf32, #tpu.memory_space<vmem>>, vector<2x256xf32>
    %cst = arith.constant dense<0.000000e+00> : vector<8x256xf32>
    %2 = tpu.matmul %0, %1, %cst {dimension_numbers = #tpu.dot_dimension_numbers<[1], [0], [0], [1], [0, 0, 1, 1], [], []>} : vector<8x2xf32>, vector<2x256xf32>, vector<8x256xf32> -> vector<8x256xf32>
    %c0_3 = arith.constant 0 : index
    %c0_4 = arith.constant 0 : index
    %3 = vector.load %arg5[%c0_3, %c0_4] : memref<1x256xf32, #tpu.memory_space<vmem>>, vector<1x256xf32>
    %4 = vector.broadcast %3 : vector<1x256xf32> to vector<8x256xf32>
    %5 = arith.addf %2, %4 : vector<8x256xf32>
    %cst_5 = arith.constant 0.000000e+00 : f32
    %6 = vector.broadcast %cst_5 : f32 to vector<8x256xf32>
    %7 = arith.maximumf %5, %6 : vector<8x256xf32>
    %8 = vector.extract_strided_slice %7 {offsets = [0, 0], sizes = [8, 128], strides = [1, 1]} : vector<8x256xf32> to vector<8x128xf32>
    %9 = vector.extract_strided_slice %7 {offsets = [0, 128], sizes = [8, 128], strides = [1, 1]} : vector<8x256xf32> to vector<8x128xf32>
    %c0_6 = arith.constant 0 : index
    %c0_7 = arith.constant 0 : index
    %10 = vector.load %arg6[%c0_6, %c0_7] : memref<128x128xf32, #tpu.memory_space<vmem>>, vector<128x128xf32>
    %cst_8 = arith.constant dense<0.000000e+00> : vector<8x128xf32>
    %11 = tpu.matmul %8, %10, %cst_8 {dimension_numbers = #tpu.dot_dimension_numbers<[1], [0], [0], [1], [0, 0, 1, 1], [], []>} : vector<8x128xf32>, vector<128x128xf32>, vector<8x128xf32> -> vector<8x128xf32>
    %c0_9 = arith.constant 0 : index
    %c0_10 = arith.constant 0 : index
    %12 = vector.load %arg9[%c0_9, %c0_10] : memref<1x128xf32, #tpu.memory_space<vmem>>, vector<1x128xf32>
    %13 = vector.broadcast %12 : vector<1x128xf32> to vector<8x128xf32>
    %14 = arith.addf %11, %13 : vector<8x128xf32>
    %cst_11 = arith.constant 0.000000e+00 : f32
    %15 = vector.broadcast %cst_11 : f32 to vector<8x128xf32>
    %16 = arith.maximumf %14, %15 : vector<8x128xf32>
    %c0_12 = arith.constant 0 : index
    %c0_13 = arith.constant 0 : index
    %17 = vector.load %arg7[%c0_12, %c0_13] : memref<128x128xf32, #tpu.memory_space<vmem>>, vector<128x128xf32>
    %cst_14 = arith.constant dense<0.000000e+00> : vector<8x128xf32>
    %18 = tpu.matmul %16, %17, %cst_14 {dimension_numbers = #tpu.dot_dimension_numbers<[1], [0], [0], [1], [0, 0, 1, 1], [], []>} : vector<8x128xf32>, vector<128x128xf32>, vector<8x128xf32> -> vector<8x128xf32>
    %c0_15 = arith.constant 0 : index
    %c0_16 = arith.constant 0 : index
    %19 = vector.load %arg10[%c0_15, %c0_16] : memref<1x128xf32, #tpu.memory_space<vmem>>, vector<1x128xf32>
    %20 = vector.broadcast %19 : vector<1x128xf32> to vector<8x128xf32>
    %21 = arith.addf %18, %20 : vector<8x128xf32>
    %cst_17 = arith.constant 0.000000e+00 : f32
    %22 = vector.broadcast %cst_17 : f32 to vector<8x128xf32>
    %23 = arith.maximumf %21, %22 : vector<8x128xf32>
    %c0_18 = arith.constant 0 : index
    %c0_19 = arith.constant 0 : index
    %24 = vector.load %arg8[%c0_18, %c0_19] : memref<128x128xf32, #tpu.memory_space<vmem>>, vector<128x128xf32>
    %cst_20 = arith.constant dense<0.000000e+00> : vector<8x128xf32>
    %25 = tpu.matmul %23, %24, %cst_20 {dimension_numbers = #tpu.dot_dimension_numbers<[1], [0], [0], [1], [0, 0, 1, 1], [], []>} : vector<8x128xf32>, vector<128x128xf32>, vector<8x128xf32> -> vector<8x128xf32>
    %c0_21 = arith.constant 0 : index
    %c0_22 = arith.constant 0 : index
    %26 = vector.load %arg11[%c0_21, %c0_22] : memref<1x128xf32, #tpu.memory_space<vmem>>, vector<1x128xf32>
    %27 = vector.broadcast %26 : vector<1x128xf32> to vector<8x128xf32>
    %28 = arith.addf %25, %27 : vector<8x128xf32>
    %c0_23 = arith.constant 0 : index
    %c0_24 = arith.constant 0 : index
    %29 = vector.load %arg12[%c0_23, %c0_24] : memref<128x128xf32, #tpu.memory_space<vmem>>, vector<128x128xf32>
    %cst_25 = arith.constant dense<0.000000e+00> : vector<8x128xf32>
    %30 = tpu.matmul %9, %29, %cst_25 {dimension_numbers = #tpu.dot_dimension_numbers<[1], [0], [0], [1], [0, 0, 1, 1], [], []>} : vector<8x128xf32>, vector<128x128xf32>, vector<8x128xf32> -> vector<8x128xf32>
    %c0_26 = arith.constant 0 : index
    %c0_27 = arith.constant 0 : index
    %31 = vector.load %arg15[%c0_26, %c0_27] : memref<1x128xf32, #tpu.memory_space<vmem>>, vector<1x128xf32>
    %32 = vector.broadcast %31 : vector<1x128xf32> to vector<8x128xf32>
    %33 = arith.addf %30, %32 : vector<8x128xf32>
    %cst_28 = arith.constant 0.000000e+00 : f32
    %34 = vector.broadcast %cst_28 : f32 to vector<8x128xf32>
    %35 = arith.maximumf %33, %34 : vector<8x128xf32>
    %c0_29 = arith.constant 0 : index
    %c0_30 = arith.constant 0 : index
    %36 = vector.load %arg13[%c0_29, %c0_30] : memref<128x128xf32, #tpu.memory_space<vmem>>, vector<128x128xf32>
    %cst_31 = arith.constant dense<0.000000e+00> : vector<8x128xf32>
    %37 = tpu.matmul %35, %36, %cst_31 {dimension_numbers = #tpu.dot_dimension_numbers<[1], [0], [0], [1], [0, 0, 1, 1], [], []>} : vector<8x128xf32>, vector<128x128xf32>, vector<8x128xf32> -> vector<8x128xf32>
    %c0_32 = arith.constant 0 : index
    %c0_33 = arith.constant 0 : index
    %38 = vector.load %arg16[%c0_32, %c0_33] : memref<1x128xf32, #tpu.memory_space<vmem>>, vector<1x128xf32>
    %39 = vector.broadcast %38 : vector<1x128xf32> to vector<8x128xf32>
    %40 = arith.addf %37, %39 : vector<8x128xf32>
    %cst_34 = arith.constant 0.000000e+00 : f32
    %41 = vector.broadcast %cst_34 : f32 to vector<8x128xf32>
    %42 = arith.maximumf %40, %41 : vector<8x128xf32>
    %c0_35 = arith.constant 0 : index
    %c0_36 = arith.constant 0 : index
    %43 = vector.load %arg14[%c0_35, %c0_36] : memref<128x128xf32, #tpu.memory_space<vmem>>, vector<128x128xf32>
    %cst_37 = arith.constant dense<0.000000e+00> : vector<8x128xf32>
    %44 = tpu.matmul %42, %43, %cst_37 {dimension_numbers = #tpu.dot_dimension_numbers<[1], [0], [0], [1], [0, 0, 1, 1], [], []>} : vector<8x128xf32>, vector<128x128xf32>, vector<8x128xf32> -> vector<8x128xf32>
    %c0_38 = arith.constant 0 : index
    %c0_39 = arith.constant 0 : index
    %45 = vector.load %arg17[%c0_38, %c0_39] : memref<1x128xf32, #tpu.memory_space<vmem>>, vector<1x128xf32>
    %46 = vector.broadcast %45 : vector<1x128xf32> to vector<8x128xf32>
    %47 = arith.addf %44, %46 : vector<8x128xf32>
    %c0_40 = arith.constant 0 : index
    %c0_41 = arith.constant 0 : index
    %48 = vector.load %arg3[%c0_40, %c0_41] : memref<2x8xf32, #tpu.memory_space<vmem>>, vector<2x8xf32>
    %cst_42 = arith.constant dense<0.000000e+00> : vector<2x128xf32>
    %49 = tpu.matmul %48, %28, %cst_42 {dimension_numbers = #tpu.dot_dimension_numbers<[1], [0], [0], [1], [0, 0, 1, 1], [], []>} : vector<2x8xf32>, vector<8x128xf32>, vector<2x128xf32> -> vector<2x128xf32>
    %cst_43 = arith.constant dense<0.000000e+00> : vector<2x128xf32>
    %50 = tpu.matmul %48, %47, %cst_43 {dimension_numbers = #tpu.dot_dimension_numbers<[1], [0], [0], [1], [0, 0, 1, 1], [], []>} : vector<2x8xf32>, vector<8x128xf32>, vector<2x128xf32> -> vector<2x128xf32>
    %c0_44 = arith.constant 0 : index
    %c0_45 = arith.constant 0 : index
    %51 = vector.load %arg18[%c0_44, %c0_45] : memref<128x128xf32, #tpu.memory_space<vmem>>, vector<128x128xf32>
    %cst_46 = arith.constant dense<0.000000e+00> : vector<2x128xf32>
    %52 = tpu.matmul %49, %51, %cst_46 {dimension_numbers = #tpu.dot_dimension_numbers<[1], [0], [0], [1], [0, 0, 1, 1], [], []>} : vector<2x128xf32>, vector<128x128xf32>, vector<2x128xf32> -> vector<2x128xf32>
    %c0_47 = arith.constant 0 : index
    %c0_48 = arith.constant 0 : index
    %53 = vector.load %arg20[%c0_47, %c0_48] : memref<1x128xf32, #tpu.memory_space<vmem>>, vector<1x128xf32>
    %54 = vector.broadcast %53 : vector<1x128xf32> to vector<2x128xf32>
    %55 = arith.addf %52, %54 : vector<2x128xf32>
    %cst_49 = arith.constant 0.000000e+00 : f32
    %56 = vector.broadcast %cst_49 : f32 to vector<2x128xf32>
    %57 = arith.maximumf %55, %56 : vector<2x128xf32>
    %c0_50 = arith.constant 0 : index
    %c0_51 = arith.constant 0 : index
    %58 = vector.load %arg19[%c0_50, %c0_51] : memref<128x128xf32, #tpu.memory_space<vmem>>, vector<128x128xf32>
    %cst_52 = arith.constant dense<0.000000e+00> : vector<2x128xf32>
    %59 = tpu.matmul %57, %58, %cst_52 {dimension_numbers = #tpu.dot_dimension_numbers<[1], [0], [0], [1], [0, 0, 1, 1], [], []>} : vector<2x128xf32>, vector<128x128xf32>, vector<2x128xf32> -> vector<2x128xf32>
    %c0_53 = arith.constant 0 : index
    %c0_54 = arith.constant 0 : index
    %60 = vector.load %arg21[%c0_53, %c0_54] : memref<1x128xf32, #tpu.memory_space<vmem>>, vector<1x128xf32>
    %61 = vector.broadcast %60 : vector<1x128xf32> to vector<2x128xf32>
    %62 = arith.addf %59, %61 : vector<2x128xf32>
    %c0_55 = arith.constant 0 : index
    %c0_56 = arith.constant 0 : index
    %63 = vector.load %arg22[%c0_55, %c0_56] : memref<128x128xf32, #tpu.memory_space<vmem>>, vector<128x128xf32>
    %cst_57 = arith.constant dense<0.000000e+00> : vector<2x128xf32>
    %64 = tpu.matmul %50, %63, %cst_57 {dimension_numbers = #tpu.dot_dimension_numbers<[1], [0], [0], [1], [0, 0, 1, 1], [], []>} : vector<2x128xf32>, vector<128x128xf32>, vector<2x128xf32> -> vector<2x128xf32>
    %c0_58 = arith.constant 0 : index
    %c0_59 = arith.constant 0 : index
    %65 = vector.load %arg24[%c0_58, %c0_59] : memref<1x128xf32, #tpu.memory_space<vmem>>, vector<1x128xf32>
    %66 = vector.broadcast %65 : vector<1x128xf32> to vector<2x128xf32>
    %67 = arith.addf %64, %66 : vector<2x128xf32>
    %cst_60 = arith.constant 0.000000e+00 : f32
    %68 = vector.broadcast %cst_60 : f32 to vector<2x128xf32>
    %69 = arith.maximumf %67, %68 : vector<2x128xf32>
    %c0_61 = arith.constant 0 : index
    %c0_62 = arith.constant 0 : index
    %70 = vector.load %arg23[%c0_61, %c0_62] : memref<128x256xf32, #tpu.memory_space<vmem>>, vector<128x256xf32>
    %cst_63 = arith.constant dense<0.000000e+00> : vector<2x256xf32>
    %71 = tpu.matmul %69, %70, %cst_63 {dimension_numbers = #tpu.dot_dimension_numbers<[1], [0], [0], [1], [0, 0, 1, 1], [], []>} : vector<2x128xf32>, vector<128x256xf32>, vector<2x256xf32> -> vector<2x256xf32>
    %c0_64 = arith.constant 0 : index
    %c0_65 = arith.constant 0 : index
    %72 = vector.load %arg25[%c0_64, %c0_65] : memref<1x256xf32, #tpu.memory_space<vmem>>, vector<1x256xf32>
    %73 = vector.broadcast %72 : vector<1x256xf32> to vector<2x256xf32>
    %74 = arith.addf %71, %73 : vector<2x256xf32>
    %75 = vector.extract_strided_slice %74 {offsets = [0, 0], sizes = [2, 128], strides = [1, 1]} : vector<2x256xf32> to vector<2x128xf32>
    %76 = vector.extract_strided_slice %74 {offsets = [0, 128], sizes = [2, 128], strides = [1, 1]} : vector<2x256xf32> to vector<2x128xf32>
    %cst_66 = arith.constant 0.000000e+00 : f32
    %77 = vector.broadcast %cst_66 : f32 to vector<2x128xf32>
    %78 = arith.subf %77, %76 : vector<2x128xf32>
    %79 = math.exp %78 : vector<2x128xf32>
    %cst_67 = arith.constant 1.000000e+00 : f32
    %80 = vector.broadcast %cst_67 : f32 to vector<2x128xf32>
    %81 = arith.addf %80, %79 : vector<2x128xf32>
    %cst_68 = arith.constant 1.000000e+00 : f32
    %82 = vector.broadcast %cst_68 : f32 to vector<2x128xf32>
    %83 = arith.divf %82, %81 : vector<2x128xf32>
    %cst_69 = arith.constant 0.899999976 : f32
    %84 = vector.broadcast %cst_69 : f32 to vector<2x128xf32>
    %85 = arith.mulf %84, %83 : vector<2x128xf32>
    %cst_70 = arith.constant 1.000000e-01 : f32
    %86 = vector.broadcast %cst_70 : f32 to vector<2x128xf32>
    %87 = arith.addf %86, %85 : vector<2x128xf32>
    %c0_71 = arith.constant 0 : index
    %c0_72 = arith.constant 0 : index
    %88 = vector.load %arg2[%c0_71, %c0_72] : memref<2x128xf32, #tpu.memory_space<vmem>>, vector<2x128xf32>
    %89 = arith.mulf %87, %88 : vector<2x128xf32>
    %90 = arith.addf %75, %89 : vector<2x128xf32>
    %c0_73 = arith.constant 0 : index
    %c0_74 = arith.constant 0 : index
    %91 = vector.load %arg26[%c0_73, %c0_74] : memref<128x128xf32, #tpu.memory_space<vmem>>, vector<128x128xf32>
    %cst_75 = arith.constant dense<0.000000e+00> : vector<2x128xf32>
    %92 = tpu.matmul %62, %91, %cst_75 {dimension_numbers = #tpu.dot_dimension_numbers<[1], [0], [0], [1], [0, 0, 1, 1], [], []>} : vector<2x128xf32>, vector<128x128xf32>, vector<2x128xf32> -> vector<2x128xf32>
    %c0_76 = arith.constant 0 : index
    %c0_77 = arith.constant 0 : index
    %93 = vector.load %arg27[%c0_76, %c0_77] : memref<128x128xf32, #tpu.memory_space<vmem>>, vector<128x128xf32>
    %cst_78 = arith.constant dense<0.000000e+00> : vector<2x128xf32>
    %94 = tpu.matmul %90, %93, %cst_78 {dimension_numbers = #tpu.dot_dimension_numbers<[1], [0], [0], [1], [0, 0, 1, 1], [], []>} : vector<2x128xf32>, vector<128x128xf32>, vector<2x128xf32> -> vector<2x128xf32>
    %95 = arith.addf %92, %94 : vector<2x128xf32>
    %c0_79 = arith.constant 0 : index
    %c0_80 = arith.constant 0 : index
    %96 = vector.load %arg28[%c0_79, %c0_80] : memref<1x128xf32, #tpu.memory_space<vmem>>, vector<1x128xf32>
    %97 = vector.broadcast %96 : vector<1x128xf32> to vector<2x128xf32>
    %98 = arith.addf %95, %97 : vector<2x128xf32>
    %c0_81 = arith.constant 0 : index
    %c0_82 = arith.constant 0 : index
    %99 = vector.load %arg29[%c0_81, %c0_82] : memref<2x128xf32, #tpu.memory_space<vmem>>, vector<2x128xf32>
    tpu.vector_store %arg29[%c0_81, %c0_82], %98 {strides = array<i32>} : memref<2x128xf32, #tpu.memory_space<vmem>>, vector<2x128xf32>,
    return
  }
  func.func @transform_0(%arg0: i32) -> (i32, i32) {
    %c0_i32 = arith.constant 0 : i32
    %c0_i32_0 = arith.constant 0 : i32
    return %arg0, %c0_i32 : i32, i32
  }
  func.func @transform_1(%arg0: i32) -> (i32, i32) {
    %c0_i32 = arith.constant 0 : i32
    %c0_i32_0 = arith.constant 0 : i32
    return %arg0, %c0_i32 : i32, i32
  }
  func.func @transform_2(%arg0: i32) -> (i32, i32) {
    %c0_i32 = arith.constant 0 : i32
    %c0_i32_0 = arith.constant 0 : i32
    %c0_i32_1 = arith.constant 0 : i32
    return %c0_i32, %c0_i32_0 : i32, i32
  }
  func.func @transform_3(%arg0: i32) -> (i32, i32) {
    %c0_i32 = arith.constant 0 : i32
    %c0_i32_0 = arith.constant 0 : i32
    %c0_i32_1 = arith.constant 0 : i32
    return %c0_i32, %c0_i32_0 : i32, i32
  }
  func.func @transform_4(%arg0: i32) -> (i32, i32) {
    %c0_i32 = arith.constant 0 : i32
    %c0_i32_0 = arith.constant 0 : i32
    %c0_i32_1 = arith.constant 0 : i32
    return %c0_i32, %c0_i32_0 : i32, i32
  }
  func.func @transform_5(%arg0: i32) -> (i32, i32) {
    %c0_i32 = arith.constant 0 : i32
    %c0_i32_0 = arith.constant 0 : i32
    %c0_i32_1 = arith.constant 0 : i32
    return %c0_i32, %c0_i32_0 : i32, i32
  }
  func.func @transform_6(%arg0: i32) -> (i32, i32) {
    %c0_i32 = arith.constant 0 : i32
    %c0_i32_0 = arith.constant 0 : i32
    %c0_i32_1 = arith.constant 0 : i32
    return %c0_i32, %c0_i32_0 : i32, i32
  }
  func.func @transform_7(%arg0: i32) -> (i32, i32) {
    %c0_i32 = arith.constant 0 : i32
    %c0_i32_0 = arith.constant 0 : i32
    %c0_i32_1 = arith.constant 0 : i32
    return %c0_i32, %c0_i32_0 : i32, i32
  }
  func.func @transform_8(%arg0: i32) -> (i32, i32) {
    %c0_i32 = arith.constant 0 : i32
    %c0_i32_0 = arith.constant 0 : i32
    %c0_i32_1 = arith.constant 0 : i32
    return %c0_i32, %c0_i32_0 : i32, i32
  }
  func.func @transform_9(%arg0: i32) -> (i32, i32) {
    %c0_i32 = arith.constant 0 : i32
    %c0_i32_0 = arith.constant 0 : i32
    %c0_i32_1 = arith.constant 0 : i32
    return %c0_i32, %c0_i32_0 : i32, i32
  }
  func.func @transform_10(%arg0: i32) -> (i32, i32) {
    %c0_i32 = arith.constant 0 : i32
    %c0_i32_0 = arith.constant 0 : i32
    %c0_i32_1 = arith.constant 0 : i32
    return %c0_i32, %c0_i32_0 : i32, i32
  }
  func.func @transform_11(%arg0: i32) -> (i32, i32) {
    %c0_i32 = arith.constant 0 : i32
    %c0_i32_0 = arith.constant 0 : i32
    %c0_i32_1 = arith.constant 0 : i32
    return %c0_i32, %c0_i32_0 : i32, i32
  }
  func.func @transform_12(%arg0: i32) -> (i32, i32) {
    %c0_i32 = arith.constant 0 : i32
    %c0_i32_0 = arith.constant 0 : i32
    %c0_i32_1 = arith.constant 0 : i32
    return %c0_i32, %c0_i32_0 : i32, i32
  }
  func.func @transform_13(%arg0: i32) -> (i32, i32) {
    %c0_i32 = arith.constant 0 : i32
    %c0_i32_0 = arith.constant 0 : i32
    %c0_i32_1 = arith.constant 0 : i32
    return %c0_i32, %c0_i32_0 : i32, i32
  }
  func.func @transform_14(%arg0: i32) -> (i32, i32) {
    %c0_i32 = arith.constant 0 : i32
    %c0_i32_0 = arith.constant 0 : i32
    %c0_i32_1 = arith.constant 0 : i32
    return %c0_i32, %c0_i32_0 : i32, i32
  }
  func.func @transform_15(%arg0: i32) -> (i32, i32) {
    %c0_i32 = arith.constant 0 : i32
    %c0_i32_0 = arith.constant 0 : i32
    %c0_i32_1 = arith.constant 0 : i32
    return %c0_i32, %c0_i32_0 : i32, i32
  }
  func.func @transform_16(%arg0: i32) -> (i32, i32) {
    %c0_i32 = arith.constant 0 : i32
    %c0_i32_0 = arith.constant 0 : i32
    %c0_i32_1 = arith.constant 0 : i32
    return %c0_i32, %c0_i32_0 : i32, i32
  }
  func.func @transform_17(%arg0: i32) -> (i32, i32) {
    %c0_i32 = arith.constant 0 : i32
    %c0_i32_0 = arith.constant 0 : i32
    %c0_i32_1 = arith.constant 0 : i32
    return %c0_i32, %c0_i32_0 : i32, i32
  }
  func.func @transform_18(%arg0: i32) -> (i32, i32) {
    %c0_i32 = arith.constant 0 : i32
    %c0_i32_0 = arith.constant 0 : i32
    %c0_i32_1 = arith.constant 0 : i32
    return %c0_i32, %c0_i32_0 : i32, i32
  }
  func.func @transform_19(%arg0: i32) -> (i32, i32) {
    %c0_i32 = arith.constant 0 : i32
    %c0_i32_0 = arith.constant 0 : i32
    %c0_i32_1 = arith.constant 0 : i32
    return %c0_i32, %c0_i32_0 : i32, i32
  }
  func.func @transform_20(%arg0: i32) -> (i32, i32) {
    %c0_i32 = arith.constant 0 : i32
    %c0_i32_0 = arith.constant 0 : i32
    %c0_i32_1 = arith.constant 0 : i32
    return %c0_i32, %c0_i32_0 : i32, i32
  }
  func.func @transform_21(%arg0: i32) -> (i32, i32) {
    %c0_i32 = arith.constant 0 : i32
    %c0_i32_0 = arith.constant 0 : i32
    %c0_i32_1 = arith.constant 0 : i32
    return %c0_i32, %c0_i32_0 : i32, i32
  }
  func.func @transform_22(%arg0: i32) -> (i32, i32) {
    %c0_i32 = arith.constant 0 : i32
    %c0_i32_0 = arith.constant 0 : i32
    %c0_i32_1 = arith.constant 0 : i32
    return %c0_i32, %c0_i32_0 : i32, i32
  }
  func.func @transform_23(%arg0: i32) -> (i32, i32) {
    %c0_i32 = arith.constant 0 : i32
    %c0_i32_0 = arith.constant 0 : i32
    %c0_i32_1 = arith.constant 0 : i32
    return %c0_i32, %c0_i32_0 : i32, i32
  }
  func.func @transform_24(%arg0: i32) -> (i32, i32) {
    %c0_i32 = arith.constant 0 : i32
    %c0_i32_0 = arith.constant 0 : i32
    %c0_i32_1 = arith.constant 0 : i32
    return %c0_i32, %c0_i32_0 : i32, i32
  }
  func.func @transform_25(%arg0: i32) -> (i32, i32) {
    %c0_i32 = arith.constant 0 : i32
    %c0_i32_0 = arith.constant 0 : i32
    %c0_i32_1 = arith.constant 0 : i32
    return %c0_i32, %c0_i32_0 : i32, i32
  }
  func.func @transform_26(%arg0: i32) -> (i32, i32) {
    %c0_i32 = arith.constant 0 : i32
    %c0_i32_0 = arith.constant 0 : i32
    %c0_i32_1 = arith.constant 0 : i32
    return %c0_i32, %c0_i32_0 : i32, i32
  }
  func.func @transform_27(%arg0: i32) -> (i32, i32) {
    %c0_i32 = arith.constant 0 : i32
    %c0_i32_0 = arith.constant 0 : i32
    %c0_i32_1 = arith.constant 0 : i32
    return %c0_i32, %c0_i32_0 : i32, i32
  }
  func.func @transform_28(%arg0: i32) -> (i32, i32) {
    %c0_i32 = arith.constant 0 : i32
    %c0_i32_0 = arith.constant 0 : i32
    return %arg0, %c0_i32 : i32, i32
  }
}

</mosaic_0001>

<llo_original>
// kernel: tpu_custom_call.1
$region0: #{tpu_custom_call.1}
  #allocation0 [shape = 'u32[]', space=smem, size = 0x4, offset = 0x4, fixed_abs, tag = 'smem constant byte address 0x4 - core index']
  #allocation1 [shape = 'u32[144,128]{1,0:T(1,128)}', space=vmem, size = 0x12000, scoped, tag = 'internal scratch']
  %s0 = inlined_call_operand.vmem [shape: f32[8,2], index: 0, kind: input, shape index: {}]
  %s1 = inlined_call_operand.vmem [shape: f32[2,128], index: 1, kind: input, shape index: {}]
  %s2 = inlined_call_operand.vmem [shape: f32[2,8], index: 2, kind: input, shape index: {}]
  %s3 = inlined_call_operand.vmem [shape: f32[2,256], index: 3, kind: input, shape index: {}]
  %s4 = inlined_call_operand.vmem [shape: f32[1,256], index: 4, kind: input, shape index: {}]
  %s5 = inlined_call_operand.hbm [shape: f32[128,128], index: 5, kind: input, shape index: {}]
  %s6 = inlined_call_operand.hbm [shape: f32[128,128], index: 6, kind: input, shape index: {}]
  %s7 = inlined_call_operand.hbm [shape: f32[128,128], index: 7, kind: input, shape index: {}]
  %s8 = inlined_call_operand.vmem [shape: f32[1,128], index: 8, kind: input, shape index: {}]
  %s9 = inlined_call_operand.vmem [shape: f32[1,128], index: 9, kind: input, shape index: {}]
  %s10 = inlined_call_operand.vmem [shape: f32[1,128], index: 10, kind: input, shape index: {}]
  %s11 = inlined_call_operand.hbm [shape: f32[128,128], index: 11, kind: input, shape index: {}]
  %s12 = inlined_call_operand.hbm [shape: f32[128,128], index: 12, kind: input, shape index: {}]
  %s13 = inlined_call_operand.hbm [shape: f32[128,128], index: 13, kind: input, shape index: {}]
  %s14 = inlined_call_operand.vmem [shape: f32[1,128], index: 14, kind: input, shape index: {}]
  %s15 = inlined_call_operand.vmem [shape: f32[1,128], index: 15, kind: input, shape index: {}]
  %s16 = inlined_call_operand.vmem [shape: f32[1,128], index: 16, kind: input, shape index: {}]
  %s17 = inlined_call_operand.hbm [shape: f32[128,128], index: 17, kind: input, shape index: {}]
  %s18 = inlined_call_operand.hbm [shape: f32[128,128], index: 18, kind: input, shape index: {}]
  %s19 = inlined_call_operand.vmem [shape: f32[1,128], index: 19, kind: input, shape index: {}]
  %s20 = inlined_call_operand.vmem [shape: f32[1,128], index: 20, kind: input, shape index: {}]
  %s21 = inlined_call_operand.hbm [shape: f32[128,128], index: 21, kind: input, shape index: {}]
  %s22 = inlined_call_operand.hbm [shape: f32[128,256], index: 22, kind: input, shape index: {}]
  %s23 = inlined_call_operand.vmem [shape: f32[1,128], index: 23, kind: input, shape index: {}]
  %s24 = inlined_call_operand.vmem [shape: f32[1,256], index: 24, kind: input, shape index: {}]
  %s25 = inlined_call_operand.hbm [shape: f32[128,128], index: 25, kind: input, shape index: {}]
  %s26 = inlined_call_operand.hbm [shape: f32[128,128], index: 26, kind: input, shape index: {}]
  %s27 = inlined_call_operand.vmem [shape: f32[1,128], index: 27, kind: input, shape index: {}]
  %s28 = inlined_call_operand.hbm [shape: f32[2,128], index: 28, kind: output, shape index: {}]
  %s29 = sld [smem:[#allocation0]]
  $region170: #{tpu_custom_call.1} parent=0
    _
  %s31 = ssub.s32 1, %s29
  %s32 = scalar_select 0, %s31, %s29
  $region1: #{tpu_custom_call.1} parent=0
    #allocation2 [shape = 'u8[65536]{0}', space=vmem, size = 0x10000, scoped, tag = 'input window, operand 5, single buffered']
    #allocation3 [shape = 's32[1]{0}', space=sflag, size = 0x4, scoped, tag = 'scoped memory for tpu_custom_call.1']
    #allocation4 [shape = 's32[1]{0}', space=sflag, size = 0x4, scoped, tag = 'scoped memory for tpu_custom_call.1']
    #allocation5 [shape = 'u8[65536]{0}', space=vmem, size = 0x10000, scoped, tag = 'input window, operand 6, single buffered']
    #allocation6 [shape = 's32[1]{0}', space=sflag, size = 0x4, scoped, tag = 'scoped memory for tpu_custom_call.1']
    #allocation7 [shape = 'u8[65536]{0}', space=vmem, size = 0x10000, scoped, tag = 'input window, operand 7, single buffered']
    #allocation8 [shape = 'u8[65536]{0}', space=vmem, size = 0x10000, scoped, tag = 'input window, operand 11, single buffered']
    #allocation9 [shape = 's32[1]{0}', space=sflag, size = 0x4, scoped, tag = 'scoped memory for tpu_custom_call.1']
    #allocation10 [shape = 'u8[65536]{0}', space=vmem, size = 0x10000, scoped, tag = 'input window, operand 12, single buffered']
    #allocation11 [shape = 'u8[65536]{0}', space=vmem, size = 0x10000, scoped, tag = 'input window, operand 13, single buffered']
    #allocation12 [shape = 's32[1]{0}', space=sflag, size = 0x4, scoped, tag = 'scoped memory for tpu_custom_call.1']
    #allocation13 [shape = 'u8[65536]{0}', space=vmem, size = 0x10000, scoped, tag = 'input window, operand 17, single buffered']
    #allocation14 [shape = 'u8[65536]{0}', space=vmem, size = 0x10000, scoped, tag = 'input window, operand 18, single buffered']
    #allocation15 [shape = 's32[1]{0}', space=sflag, size = 0x4, scoped, tag = 'scoped memory for tpu_custom_call.1']
    #allocation16 [shape = 'u8[65536]{0}', space=vmem, size = 0x10000, scoped, tag = 'input window, operand 21, single buffered']
    #allocation17 [shape = 'u8[131072]{0}', space=vmem, size = 0x20000, scoped, tag = 'input window, operand 22, single buffered']
    #allocation18 [shape = 's32[1]{0}', space=sflag, size = 0x4, scoped, tag = 'scoped memory for tpu_custom_call.1']
    #allocation19 [shape = 'u8[65536]{0}', space=vmem, size = 0x10000, scoped, tag = 'input window, operand 25, single buffered']
    #allocation20 [shape = 'u8[65536]{0}', space=vmem, size = 0x10000, scoped, tag = 'input window, operand 26, single buffered']
    #allocation21 [shape = 's32[1]{0}', space=sflag, size = 0x4, scoped, tag = 'scoped memory for tpu_custom_call.1']
    #allocation22 [shape = 'u8[1024]{0}', space=vmem, size = 0x400, scoped, tag = 'output window, operand 0, single buffered']
    %33 = vsyncpa [#allocation3], 0
    %34 = vsyncpa [#allocation6], 0
    %35 = vsyncpa [#allocation9], 0
    %36 = vsyncpa [#allocation12], 0
    %37 = vsyncpa [#allocation15], 0
    %38 = vsyncpa [#allocation18], 0
    %39 = vsyncpa [#allocation21], 0
    %40 = vsyncpa [#allocation4], 0
    // Predicated region
    $region2: #{tpu_custom_call.1} parent=1 // pred_check
      _
    $region3: #{tpu_custom_call.1} parent=1 // pred_check_branch
      %42 = sbr.rel (0) target = $region5
    $region4: #{tpu_custom_call.1} parent=1 // pred_region
      _
    $region5: #{tpu_custom_call.1} parent=1 // pred_fallthru
      _
    // Predicated region
    $region6: #{tpu_custom_call.1} parent=1 // pred_check
      _
    $region7: #{tpu_custom_call.1} parent=1 // pred_check_branch
      %44 = sbr.rel (0) target = $region9
    $region8: #{tpu_custom_call.1} parent=1 // pred_region
      _
    $region9: #{tpu_custom_call.1} parent=1 // pred_fallthru
      _
    // Predicated region
    $region10: #{tpu_custom_call.1} parent=1 // pred_check
      _
    $region11: #{tpu_custom_call.1} parent=1 // pred_check_branch
      %46 = sbr.rel (0) target = $region13
    $region12: #{tpu_custom_call.1} parent=1 // pred_region
      _
    $region13: #{tpu_custom_call.1} parent=1 // pred_fallthru
      _
    // Predicated region
    $region14: #{tpu_custom_call.1} parent=1 // pred_check
      _
    $region15: #{tpu_custom_call.1} parent=1 // pred_check_branch
      %48 = sbr.rel (0) target = $region17
    $region16: #{tpu_custom_call.1} parent=1 // pred_region
      _
    $region17: #{tpu_custom_call.1} parent=1 // pred_fallthru
      _
    // Predicated region
    $region18: #{tpu_custom_call.1} parent=1 // pred_check
      _
    $region19: #{tpu_custom_call.1} parent=1 // pred_check_branch
      %50 = sbr.rel (0) target = $region21
    $region20: #{tpu_custom_call.1} parent=1 // pred_region
      _
    $region21: #{tpu_custom_call.1} parent=1 // pred_fallthru
      _
    // Predicated region
    $region22: #{tpu_custom_call.1} parent=1 // pred_check
      _
    $region23: #{tpu_custom_call.1} parent=1 // pred_check_branch
      %52 = sbr.rel (0) target = $region25
    $region24: #{tpu_custom_call.1} parent=1 // pred_region
      %s54 = ssub.s32 2048, 2048
      %55 = vsyncadd [#allocation3], %s54
      %s56 = sshll.u32 [#allocation2], 4
      %s57 = int_to_ptr.vmem [resolvable:$true] %s56
      %62 = dma.hbm_to_vmem [thread:$0]  %s5, 2048, %s57, [#allocation3], 128, 128, 8
    $region25: #{tpu_custom_call.1} parent=1 // pred_fallthru
      _
    // Predicated region
    $region26: #{tpu_custom_call.1} parent=1 // pred_check
      _
    $region27: #{tpu_custom_call.1} parent=1 // pred_check_branch
      %64 = sbr.rel (0) target = $region29
    $region28: #{tpu_custom_call.1} parent=1 // pred_region
      %s66 = ssub.s32 2048, 2048
      %67 = vsyncadd [#allocation6], %s66
      %s68 = sshll.u32 [#allocation5], 4
      %s69 = int_to_ptr.vmem [resolvable:$true] %s68
      %74 = dma.hbm_to_vmem [thread:$0]  %s6, 2048, %s69, [#allocation6], 128, 128, 8
    $region29: #{tpu_custom_call.1} parent=1 // pred_fallthru
      _
    // Predicated region
    $region30: #{tpu_custom_call.1} parent=1 // pred_check
      _
    $region31: #{tpu_custom_call.1} parent=1 // pred_check_branch
      %76 = sbr.rel (0) target = $region33
    $region32: #{tpu_custom_call.1} parent=1 // pred_region
      %s78 = ssub.s32 2048, 2048
      %79 = vsyncadd [#allocation6], %s78
      %s80 = sshll.u32 [#allocation7], 4
      %s81 = int_to_ptr.vmem [resolvable:$true] %s80
      %86 = dma.hbm_to_vmem [thread:$0]  %s7, 2048, %s81, [#allocation6], 128, 128, 8
    $region33: #{tpu_custom_call.1} parent=1 // pred_fallthru
      _
    // Predicated region
    $region34: #{tpu_custom_call.1} parent=1 // pred_check
      _
    $region35: #{tpu_custom_call.1} parent=1 // pred_check_branch
      %88 = sbr.rel (0) target = $region37
    $region36: #{tpu_custom_call.1} parent=1 // pred_region
      _
    $region37: #{tpu_custom_call.1} parent=1 // pred_fallthru
      _
    // Predicated region
    $region38: #{tpu_custom_call.1} parent=1 // pred_check
      _
    $region39: #{tpu_custom_call.1} parent=1 // pred_check_branch
      %90 = sbr.rel (0) target = $region41
    $region40: #{tpu_custom_call.1} parent=1 // pred_region
      _
    $region41: #{tpu_custom_call.1} parent=1 // pred_fallthru
      _
    // Predicated region
    $region42: #{tpu_custom_call.1} parent=1 // pred_check
      _
    $region43: #{tpu_custom_call.1} parent=1 // pred_check_branch
      %92 = sbr.rel (0) target = $region45
    $region44: #{tpu_custom_call.1} parent=1 // pred_region
      _
    $region45: #{tpu_custom_call.1} parent=1 // pred_fallthru
      _
    // Predicated region
    $region46: #{tpu_custom_call.1} parent=1 // pred_check
      _
    $region47: #{tpu_custom_call.1} parent=1 // pred_check_branch
      %94 = sbr.rel (0) target = $region49
    $region48: #{tpu_custom_call.1} parent=1 // pred_region
      %s96 = ssub.s32 2048, 2048
      %97 = vsyncadd [#allocation9], %s96
      %s98 = sshll.u32 [#allocation8], 4
      %s99 = int_to_ptr.vmem [resolvable:$true] %s98
      %104 = dma.hbm_to_vmem [thread:$0]  %s11, 2048, %s99, [#allocation9], 128, 128, 8
    $region49: #{tpu_custom_call.1} parent=1 // pred_fallthru
      _
    // Predicated region
    $region50: #{tpu_custom_call.1} parent=1 // pred_check
      _
    $region51: #{tpu_custom_call.1} parent=1 // pred_check_branch
      %106 = sbr.rel (0) target = $region53
    $region52: #{tpu_custom_call.1} parent=1 // pred_region
      %s108 = ssub.s32 2048, 2048
      %109 = vsyncadd [#allocation9], %s108
      %s110 = sshll.u32 [#allocation10], 4
      %s111 = int_to_ptr.vmem [resolvable:$true] %s110
      %116 = dma.hbm_to_vmem [thread:$0]  %s12, 2048, %s111, [#allocation9], 128, 128, 8
    $region53: #{tpu_custom_call.1} parent=1 // pred_fallthru
      _
    // Predicated region
    $region54: #{tpu_custom_call.1} parent=1 // pred_check
      _
    $region55: #{tpu_custom_call.1} parent=1 // pred_check_branch
      %118 = sbr.rel (0) target = $region57
    $region56: #{tpu_custom_call.1} parent=1 // pred_region
      %s120 = ssub.s32 2048, 2048
      %121 = vsyncadd [#allocation12], %s120
      %s122 = sshll.u32 [#allocation11], 4
      %s123 = int_to_ptr.vmem [resolvable:$true] %s122
      %128 = dma.hbm_to_vmem [thread:$0]  %s13, 2048, %s123, [#allocation12], 128, 128, 8
    $region57: #{tpu_custom_call.1} parent=1 // pred_fallthru
      _
    // Predicated region
    $region58: #{tpu_custom_call.1} parent=1 // pred_check
      _
    $region59: #{tpu_custom_call.1} parent=1 // pred_check_branch
      %130 = sbr.rel (0) target = $region61
    $region60: #{tpu_custom_call.1} parent=1 // pred_region
      _
    $region61: #{tpu_custom_call.1} parent=1 // pred_fallthru
      _
    // Predicated region
    $region62: #{tpu_custom_call.1} parent=1 // pred_check
      _
    $region63: #{tpu_custom_call.1} parent=1 // pred_check_branch
      %132 = sbr.rel (0) target = $region65
    $region64: #{tpu_custom_call.1} parent=1 // pred_region
      _
    $region65: #{tpu_custom_call.1} parent=1 // pred_fallthru
      _
    // Predicated region
    $region66: #{tpu_custom_call.1} parent=1 // pred_check
      _
    $region67: #{tpu_custom_call.1} parent=1 // pred_check_branch
      %134 = sbr.rel (0) target = $region69
    $region68: #{tpu_custom_call.1} parent=1 // pred_region
      _
    $region69: #{tpu_custom_call.1} parent=1 // pred_fallthru
      _
    // Predicated region
    $region70: #{tpu_custom_call.1} parent=1 // pred_check
      _
    $region71: #{tpu_custom_call.1} parent=1 // pred_check_branch
      %136 = sbr.rel (0) target = $region73
    $region72: #{tpu_custom_call.1} parent=1 // pred_region
      %s138 = ssub.s32 2048, 2048
      %139 = vsyncadd [#allocation12], %s138
      %s140 = sshll.u32 [#allocation13], 4
      %s141 = int_to_ptr.vmem [resolvable:$true] %s140
      %146 = dma.hbm_to_vmem [thread:$0]  %s17, 2048, %s141, [#allocation12], 128, 128, 8
    $region73: #{tpu_custom_call.1} parent=1 // pred_fallthru
      _
    // Predicated region
    $region74: #{tpu_custom_call.1} parent=1 // pred_check
      _
    $region75: #{tpu_custom_call.1} parent=1 // pred_check_branch
      %148 = sbr.rel (0) target = $region77
    $region76: #{tpu_custom_call.1} parent=1 // pred_region
      %s150 = ssub.s32 2048, 2048
      %151 = vsyncadd [#allocation15], %s150
      %s152 = sshll.u32 [#allocation14], 4
      %s153 = int_to_ptr.vmem [resolvable:$true] %s152
      %158 = dma.hbm_to_vmem [thread:$0]  %s18, 2048, %s153, [#allocation15], 128, 128, 8
    $region77: #{tpu_custom_call.1} parent=1 // pred_fallthru
      _
    // Predicated region
    $region78: #{tpu_custom_call.1} parent=1 // pred_check
      _
    $region79: #{tpu_custom_call.1} parent=1 // pred_check_branch
      %160 = sbr.rel (0) target = $region81
    $region80: #{tpu_custom_call.1} parent=1 // pred_region
      _
    $region81: #{tpu_custom_call.1} parent=1 // pred_fallthru
      _
    // Predicated region
    $region82: #{tpu_custom_call.1} parent=1 // pred_check
      _
    $region83: #{tpu_custom_call.1} parent=1 // pred_check_branch
      %162 = sbr.rel (0) target = $region85
    $region84: #{tpu_custom_call.1} parent=1 // pred_region
      _
    $region85: #{tpu_custom_call.1} parent=1 // pred_fallthru
      _
    // Predicated region
    $region86: #{tpu_custom_call.1} parent=1 // pred_check
      _
    $region87: #{tpu_custom_call.1} parent=1 // pred_check_branch
      %164 = sbr.rel (0) target = $region89
    $region88: #{tpu_custom_call.1} parent=1 // pred_region
      %s166 = ssub.s32 2048, 2048
      %167 = vsyncadd [#allocation15], %s166
      %s168 = sshll.u32 [#allocation16], 4
      %s169 = int_to_ptr.vmem [resolvable:$true] %s168
      %174 = dma.hbm_to_vmem [thread:$0]  %s21, 2048, %s169, [#allocation15], 128, 128, 8
    $region89: #{tpu_custom_call.1} parent=1 // pred_fallthru
      _
    // Predicated region
    $region90: #{tpu_custom_call.1} parent=1 // pred_check
      _
    $region91: #{tpu_custom_call.1} parent=1 // pred_check_branch
      %176 = sbr.rel (0) target = $region93
    $region92: #{tpu_custom_call.1} parent=1 // pred_region
      %s178 = ssub.s32 4096, 4096
      %179 = vsyncadd [#allocation18], %s178
      %s180 = sshll.u32 [#allocation17], 4
      %s181 = int_to_ptr.vmem [resolvable:$true] %s180
      %186 = dma.hbm_to_vmem [thread:$0]  %s22, 4096, %s181, [#allocation18], 256, 256, 16
    $region93: #{tpu_custom_call.1} parent=1 // pred_fallthru
      _
    // Predicated region
    $region94: #{tpu_custom_call.1} parent=1 // pred_check
      _
    $region95: #{tpu_custom_call.1} parent=1 // pred_check_branch
      %188 = sbr.rel (0) target = $region97
    $region96: #{tpu_custom_call.1} parent=1 // pred_region
      _
    $region97: #{tpu_custom_call.1} parent=1 // pred_fallthru
      _
    // Predicated region
    $region98: #{tpu_custom_call.1} parent=1 // pred_check
      _
    $region99: #{tpu_custom_call.1} parent=1 // pred_check_branch
      %190 = sbr.rel (0) target = $region101
    $region100: #{tpu_custom_call.1} parent=1 // pred_region
      _
    $region101: #{tpu_custom_call.1} parent=1 // pred_fallthru
      _
    // Predicated region
    $region102: #{tpu_custom_call.1} parent=1 // pred_check
      _
    $region103: #{tpu_custom_call.1} parent=1 // pred_check_branch
      %192 = sbr.rel (0) target = $region105
    $region104: #{tpu_custom_call.1} parent=1 // pred_region
      %s194 = ssub.s32 2048, 2048
      %195 = vsyncadd [#allocation18], %s194
      %s196 = sshll.u32 [#allocation19], 4
      %s197 = int_to_ptr.vmem [resolvable:$true] %s196
      %202 = dma.hbm_to_vmem [thread:$0]  %s25, 2048, %s197, [#allocation18], 128, 128, 8
    $region105: #{tpu_custom_call.1} parent=1 // pred_fallthru
      _
    // Predicated region
    $region106: #{tpu_custom_call.1} parent=1 // pred_check
      _
    $region107: #{tpu_custom_call.1} parent=1 // pred_check_branch
      %204 = sbr.rel (0) target = $region109
    $region108: #{tpu_custom_call.1} parent=1 // pred_region
      %s206 = ssub.s32 2048, 2048
      %207 = vsyncadd [#allocation21], %s206
      %s208 = sshll.u32 [#allocation20], 4
      %s209 = int_to_ptr.vmem [resolvable:$true] %s208
      %214 = dma.hbm_to_vmem [thread:$0]  %s26, 2048, %s209, [#allocation21], 128, 128, 8
    $region109: #{tpu_custom_call.1} parent=1 // pred_fallthru
      _
    // Predicated region
    $region110: #{tpu_custom_call.1} parent=1 // pred_check
      _
    $region111: #{tpu_custom_call.1} parent=1 // pred_check_branch
      %216 = sbr.rel (0) target = $region113
    $region112: #{tpu_custom_call.1} parent=1 // pred_region
      _
    $region113: #{tpu_custom_call.1} parent=1 // pred_fallthru
      _
    // Predicated region
    $region114: #{tpu_custom_call.1} parent=1 // pred_check
      _
    $region115: #{tpu_custom_call.1} parent=1 // pred_check_branch
      %218 = sbr.rel (0) target = $region117
    $region116: #{tpu_custom_call.1} parent=1 // pred_region
      %219 = dma.done [#allocation3], 2048
    $region117: #{tpu_custom_call.1} parent=1 // pred_fallthru
      _
    // Predicated region
    $region118: #{tpu_custom_call.1} parent=1 // pred_check
      _
    $region119: #{tpu_custom_call.1} parent=1 // pred_check_branch
      %221 = sbr.rel (0) target = $region121
    $region120: #{tpu_custom_call.1} parent=1 // pred_region
      %222 = dma.done [#allocation6], 2048
    $region121: #{tpu_custom_call.1} parent=1 // pred_fallthru
      _
    // Predicated region
    $region122: #{tpu_custom_call.1} parent=1 // pred_check
      _
    $region123: #{tpu_custom_call.1} parent=1 // pred_check_branch
      %224 = sbr.rel (0) target = $region125
    $region124: #{tpu_custom_call.1} parent=1 // pred_region
      %225 = dma.done [#allocation6], 2048
    $region125: #{tpu_custom_call.1} parent=1 // pred_fallthru
      _
    // Predicated region
    $region126: #{tpu_custom_call.1} parent=1 // pred_check
      _
    $region127: #{tpu_custom_call.1} parent=1 // pred_check_branch
      %227 = sbr.rel (0) target = $region129
    $region128: #{tpu_custom_call.1} parent=1 // pred_region
      %228 = dma.done [#allocation9], 2048
    $region129: #{tpu_custom_call.1} parent=1 // pred_fallthru
      _
    // Predicated region
    $region130: #{tpu_custom_call.1} parent=1 // pred_check
      _
    $region131: #{tpu_custom_call.1} parent=1 // pred_check_branch
      %230 = sbr.rel (0) target = $region133
    $region132: #{tpu_custom_call.1} parent=1 // pred_region
      %231 = dma.done [#allocation9], 2048
    $region133: #{tpu_custom_call.1} parent=1 // pred_fallthru
      _
    // Predicated region
    $region134: #{tpu_custom_call.1} parent=1 // pred_check
      _
    $region135: #{tpu_custom_call.1} parent=1 // pred_check_branch
      %233 = sbr.rel (0) target = $region137
    $region136: #{tpu_custom_call.1} parent=1 // pred_region
      %234 = dma.done [#allocation12], 2048
    $region137: #{tpu_custom_call.1} parent=1 // pred_fallthru
      _
    // Predicated region
    $region138: #{tpu_custom_call.1} parent=1 // pred_check
      _
    $region139: #{tpu_custom_call.1} parent=1 // pred_check_branch
      %236 = sbr.rel (0) target = $region141
    $region140: #{tpu_custom_call.1} parent=1 // pred_region
      %237 = dma.done [#allocation12], 2048
    $region141: #{tpu_custom_call.1} parent=1 // pred_fallthru
      _
    // Predicated region
    $region142: #{tpu_custom_call.1} parent=1 // pred_check
      _
    $region143: #{tpu_custom_call.1} parent=1 // pred_check_branch
      %239 = sbr.rel (0) target = $region145
    $region144: #{tpu_custom_call.1} parent=1 // pred_region
      %240 = dma.done [#allocation15], 2048
    $region145: #{tpu_custom_call.1} parent=1 // pred_fallthru
      _
    // Predicated region
    $region146: #{tpu_custom_call.1} parent=1 // pred_check
      _
    $region147: #{tpu_custom_call.1} parent=1 // pred_check_branch
      %242 = sbr.rel (0) target = $region149
    $region148: #{tpu_custom_call.1} parent=1 // pred_region
      %243 = dma.done [#allocation15], 2048
    $region149: #{tpu_custom_call.1} parent=1 // pred_fallthru
      _
    // Predicated region
    $region150: #{tpu_custom_call.1} parent=1 // pred_check
      _
    $region151: #{tpu_custom_call.1} parent=1 // pred_check_branch
      %245 = sbr.rel (0) target = $region153
    $region152: #{tpu_custom_call.1} parent=1 // pred_region
      %246 = dma.done [#allocation18], 4096
    $region153: #{tpu_custom_call.1} parent=1 // pred_fallthru
      _
    // Predicated region
    $region154: #{tpu_custom_call.1} parent=1 // pred_check
      _
    $region155: #{tpu_custom_call.1} parent=1 // pred_check_branch
      %248 = sbr.rel (0) target = $region157
    $region156: #{tpu_custom_call.1} parent=1 // pred_region
      %249 = dma.done [#allocation18], 2048
    $region157: #{tpu_custom_call.1} parent=1 // pred_fallthru
      _
    // Predicated region
    $region158: #{tpu_custom_call.1} parent=1 // pred_check
      _
    $region159: #{tpu_custom_call.1} parent=1 // pred_check_branch
      %251 = sbr.rel (0) target = $region161
    $region160: #{tpu_custom_call.1} parent=1 // pred_region
      %252 = dma.done [#allocation21], 2048
    $region161: #{tpu_custom_call.1} parent=1 // pred_fallthru
      _
    %v253 = vld [vmem:[%s0] sm:$0xff]
    %v254 = vld [vmem:[%s3] sm:$0xf]
    %v255 = vld [vmem:[%s4] sm:$0x3]
    %v257 = vlaneseq
    %v258 = vshrl.u32 %v257, 7
    %v259 = vsub.s32 0, %v258
    %v260 = vrot.slane %v255, %v259
    %v261 = vlaneseq
    %v262 = vshrl.u32 %v261, 7
    %v263 = vsub.s32 1, %v262
    %v264 = vrot.slane %v255, %v263
    %v269 = vunpack.c.l.s4 1983009808
    %v270 = vunpack.c.0.s8 %v269
    %v271 = vlaneseq
    %v272 = vshrl.u32 %v271, 7
    %v273 = vsub.s32 %v270, %v272
    %v274 = vrot.slane %v254, %v273
    %v275 = vcombine.high %v274, %v274
    %vm276 = vcmask 15360
    %v278 = vsel %vm276, %v253, 0
    %vm280 = vcmask 1041408
    %v281 = vsel %vm280, %v274, 0
    %v283 = vsel %vm280, %v275, 0
    %285 = vmatprep.subr.mxu0 %v283
    %286 = vmatpush1.msra.mxu0 %v281
    %287 = vmatprep.subr.mxu0 0.0
    %288 = vmatpush1.msra.mxu0 0.0
    %289 = vmatprep.subr.mxu0 0.0
    %290 = vmatpush1.msra.mxu0 0.0
    %291 = vmatprep.subr.mxu0 0.0
    %292 = vmatpush1.msra.mxu0 0.0
    %293 = vmatprep.subr.mxu0 0.0
    %294 = vmatpush1.msra.mxu0 0.0
    %295 = vmatprep.subr.mxu0 0.0
    %296 = vmatpush1.msra.mxu0 0.0
    %297 = vmatprep.subr.mxu0 0.0
    %298 = vmatpush1.msra.mxu0 0.0
    %299 = vmatprep.subr.mxu0 0.0
    %300 = vmatpush1.msra.mxu0 0.0
    %301 = vmatprep.subr.mxu0 0.0
    %302 = vmatpush1.msra.mxu0 0.0
    %303 = vmatprep.subr.mxu0 0.0
    %304 = vmatpush1.msra.mxu0 0.0
    %305 = vmatprep.subr.mxu0 0.0
    %306 = vmatpush1.msra.mxu0 0.0
    %307 = vmatprep.subr.mxu0 0.0
    %308 = vmatpush1.msra.mxu0 0.0
    %309 = vmatprep.subr.mxu0 0.0
    %310 = vmatpush1.msra.mxu0 0.0
    %311 = vmatprep.subr.mxu0 0.0
    %312 = vmatpush1.msra.mxu0 0.0
    %313 = vmatprep.subr.mxu0 0.0
    %314 = vmatpush1.msra.mxu0 0.0
    %315 = vmatprep.subr.mxu0 0.0
    %316 = vmatpush1.msra.mxu0 0.0
    %317 = vmatprep.subr.mxu0 0.0
    %318 = vmatpush1.msra.mxu0 0.0
    %319 = vmatprep.subr.mxu0 0.0
    %320 = vmatpush1.msra.mxu0 0.0
    %321 = vmatprep.subr.mxu0 0.0
    %322 = vmatpush1.msra.mxu0 0.0
    %323 = vmatprep.subr.mxu0 0.0
    %324 = vmatpush1.msra.mxu0 0.0
    %325 = vmatprep.subr.mxu0 0.0
    %326 = vmatpush1.msra.mxu0 0.0
    %327 = vmatprep.subr.mxu0 0.0
    %328 = vmatpush1.msra.mxu0 0.0
    %329 = vmatprep.subr.mxu0 0.0
    %330 = vmatpush1.msra.mxu0 0.0
    %331 = vmatprep.subr.mxu0 0.0
    %332 = vmatpush1.msra.mxu0 0.0
    %333 = vmatprep.subr.mxu0 0.0
    %334 = vmatpush1.msra.mxu0 0.0
    %335 = vmatprep.subr.mxu0 0.0
    %336 = vmatpush1.msra.mxu0 0.0
    %337 = vmatprep.subr.mxu0 0.0
    %338 = vmatpush1.msra.mxu0 0.0
    %339 = vmatprep.subr.mxu0 0.0
    %340 = vmatpush1.msra.mxu0 0.0
    %341 = vmatprep.subr.mxu0 0.0
    %342 = vmatpush1.msra.mxu0 0.0
    %343 = vmatprep.subr.mxu0 0.0
    %344 = vmatpush1.msra.mxu0 0.0
    %345 = vmatprep.subr.mxu0 0.0
    %346 = vmatpush1.msra.mxu0 0.0
    %347 = vmatprep.subr.mxu0 0.0
    %348 = vmatpush1.msra.mxu0 0.0
    %349 = vmatprep.mubr.f32.mxu0 0.0
    %350 = vmatmul.mubr.f32.gmra.mrb[0].mxu0 %v278
    %v351 = vpop.f32.mrb[0].mxu0
    %v352 = vadd.f32 %v260, %v351
    %v353 = vpop.f32.mrb[0].mxu0
    %v354 = vadd.f32 %v264, %v353
    %355 = vdwg.mxu0
    %v356 = vmax.f32 %v352, 0.0
    %v357 = vmax.f32 %v354, 0.0
    %v358 = vld [vmem:[#allocation2] sm:$0xff]
    %v359 = vld [vmem:[#allocation2 + $0x8] sm:$0xff]
    %v360 = vld [vmem:[#allocation2 + $0x10] sm:$0xff]
    %v361 = vld [vmem:[#allocation2 + $0x18] sm:$0xff]
    %v362 = vld [vmem:[#allocation2 + $0x20] sm:$0xff]
    %v363 = vld [vmem:[#allocation2 + $0x28] sm:$0xff]
    %v364 = vld [vmem:[#allocation2 + $0x30] sm:$0xff]
    %v365 = vld [vmem:[#allocation2 + $0x38] sm:$0xff]
    %v366 = vld [vmem:[#allocation2 + $0x40] sm:$0xff]
    %v367 = vld [vmem:[#allocation2 + $0x48] sm:$0xff]
    %v368 = vld [vmem:[#allocation2 + $0x50] sm:$0xff]
    %v369 = vld [vmem:[#allocation2 + $0x58] sm:$0xff]
    %v370 = vld [vmem:[#allocation2 + $0x60] sm:$0xff]
    %v371 = vld [vmem:[#allocation2 + $0x68] sm:$0xff]
    %v372 = vld [vmem:[#allocation2 + $0x70] sm:$0xff]
    %v373 = vld [vmem:[#allocation2 + $0x78] sm:$0xff]
    %v374 = vld [vmem:[%s8] sm:$0x1]
    %v376 = vlaneseq
    %v377 = vshrl.u32 %v376, 7
    %v378 = vsub.s32 0, %v377
    %v379 = vrot.slane %v374, %v378
    %381 = vmatprep.subr.mxu0 0.0
    %382 = vmatpush1.msra.mxu0 %v358
    %383 = vmatprep.subr.mxu0 0.0
    %384 = vmatpush1.msra.mxu0 %v359
    %385 = vmatprep.subr.mxu0 0.0
    %386 = vmatpush1.msra.mxu0 %v360
    %387 = vmatprep.subr.mxu0 0.0
    %388 = vmatpush1.msra.mxu0 %v361
    %389 = vmatprep.subr.mxu0 0.0
    %390 = vmatpush1.msra.mxu0 %v362
    %391 = vmatprep.subr.mxu0 0.0
    %392 = vmatpush1.msra.mxu0 %v363
    %393 = vmatprep.subr.mxu0 0.0
    %394 = vmatpush1.msra.mxu0 %v364
    %395 = vmatprep.subr.mxu0 0.0
    %396 = vmatpush1.msra.mxu0 %v365
    %397 = vmatprep.subr.mxu0 0.0
    %398 = vmatpush1.msra.mxu0 %v366
    %399 = vmatprep.subr.mxu0 0.0
    %400 = vmatpush1.msra.mxu0 %v367
    %401 = vmatprep.subr.mxu0 0.0
    %402 = vmatpush1.msra.mxu0 %v368
    %403 = vmatprep.subr.mxu0 0.0
    %404 = vmatpush1.msra.mxu0 %v369
    %405 = vmatprep.subr.mxu0 0.0
    %406 = vmatpush1.msra.mxu0 %v370
    %407 = vmatprep.subr.mxu0 0.0
    %408 = vmatpush1.msra.mxu0 %v371
    %409 = vmatprep.subr.mxu0 0.0
    %410 = vmatpush1.msra.mxu0 %v372
    %411 = vmatprep.subr.mxu0 0.0
    %412 = vmatpush1.msra.mxu0 %v373
    %413 = vmatprep.subr.mxu0 0.0
    %414 = vmatpush1.msra.mxu0 0.0
    %415 = vmatprep.subr.mxu0 0.0
    %416 = vmatpush1.msra.mxu0 0.0
    %417 = vmatprep.subr.mxu0 0.0
    %418 = vmatpush1.msra.mxu0 0.0
    %419 = vmatprep.subr.mxu0 0.0
    %420 = vmatpush1.msra.mxu0 0.0
    %421 = vmatprep.subr.mxu0 0.0
    %422 = vmatpush1.msra.mxu0 0.0
    %423 = vmatprep.subr.mxu0 0.0
    %424 = vmatpush1.msra.mxu0 0.0
    %425 = vmatprep.subr.mxu0 0.0
    %426 = vmatpush1.msra.mxu0 0.0
    %427 = vmatprep.subr.mxu0 0.0
    %428 = vmatpush1.msra.mxu0 0.0
    %429 = vmatprep.subr.mxu0 0.0
    %430 = vmatpush1.msra.mxu0 0.0
    %431 = vmatprep.subr.mxu0 0.0
    %432 = vmatpush1.msra.mxu0 0.0
    %433 = vmatprep.subr.mxu0 0.0
    %434 = vmatpush1.msra.mxu0 0.0
    %435 = vmatprep.subr.mxu0 0.0
    %436 = vmatpush1.msra.mxu0 0.0
    %437 = vmatprep.subr.mxu0 0.0
    %438 = vmatpush1.msra.mxu0 0.0
    %439 = vmatprep.subr.mxu0 0.0
    %440 = vmatpush1.msra.mxu0 0.0
    %441 = vmatprep.subr.mxu0 0.0
    %442 = vmatpush1.msra.mxu0 0.0
    %443 = vmatprep.subr.mxu0 0.0
    %444 = vmatpush1.msra.mxu0 0.0
    %445 = vmatprep.mubr.f32.mxu0 0.0
    %446 = vmatmul.mubr.f32.gmra.mrb[0].mxu0 %v356
    %v447 = vpop.f32.mrb[0].mxu0
    %v448 = vadd.f32 %v379, %v447
    %v449 = vpop.f32.mrb[0].mxu0
    %450 = vdwg.mxu0
    %v451 = vmax.f32 %v448, 0.0
    %v452 = vld [vmem:[#allocation5] sm:$0xff]
    %v453 = vld [vmem:[#allocation5 + $0x8] sm:$0xff]
    %v454 = vld [vmem:[#allocation5 + $0x10] sm:$0xff]
    %v455 = vld [vmem:[#allocation5 + $0x18] sm:$0xff]
    %v456 = vld [vmem:[#allocation5 + $0x20] sm:$0xff]
    %v457 = vld [vmem:[#allocation5 + $0x28] sm:$0xff]
    %v458 = vld [vmem:[#allocation5 + $0x30] sm:$0xff]
    %v459 = vld [vmem:[#allocation5 + $0x38] sm:$0xff]
    %v460 = vld [vmem:[#allocation5 + $0x40] sm:$0xff]
    %v461 = vld [vmem:[#allocation5 + $0x48] sm:$0xff]
    %v462 = vld [vmem:[#allocation5 + $0x50] sm:$0xff]
    %v463 = vld [vmem:[#allocation5 + $0x58] sm:$0xff]
    %v464 = vld [vmem:[#allocation5 + $0x60] sm:$0xff]
    %v465 = vld [vmem:[#allocation5 + $0x68] sm:$0xff]
    %v466 = vld [vmem:[#allocation5 + $0x70] sm:$0xff]
    %v467 = vld [vmem:[#allocation5 + $0x78] sm:$0xff]
    %v468 = vld [vmem:[%s9] sm:$0x1]
    %v470 = vlaneseq
    %v471 = vshrl.u32 %v470, 7
    %v472 = vsub.s32 0, %v471
    %v473 = vrot.slane %v468, %v472
    %475 = vmatprep.subr.mxu0 0.0
    %476 = vmatpush1.msra.mxu0 %v452
    %477 = vmatprep.subr.mxu0 0.0
    %478 = vmatpush1.msra.mxu0 %v453
    %479 = vmatprep.subr.mxu0 0.0
    %480 = vmatpush1.msra.mxu0 %v454
    %481 = vmatprep.subr.mxu0 0.0
    %482 = vmatpush1.msra.mxu0 %v455
    %483 = vmatprep.subr.mxu0 0.0
    %484 = vmatpush1.msra.mxu0 %v456
    %485 = vmatprep.subr.mxu0 0.0
    %486 = vmatpush1.msra.mxu0 %v457
    %487 = vmatprep.subr.mxu0 0.0
    %488 = vmatpush1.msra.mxu0 %v458
    %489 = vmatprep.subr.mxu0 0.0
    %490 = vmatpush1.msra.mxu0 %v459
    %491 = vmatprep.subr.mxu0 0.0
    %492 = vmatpush1.msra.mxu0 %v460
    %493 = vmatprep.subr.mxu0 0.0
    %494 = vmatpush1.msra.mxu0 %v461
    %495 = vmatprep.subr.mxu0 0.0
    %496 = vmatpush1.msra.mxu0 %v462
    %497 = vmatprep.subr.mxu0 0.0
    %498 = vmatpush1.msra.mxu0 %v463
    %499 = vmatprep.subr.mxu0 0.0
    %500 = vmatpush1.msra.mxu0 %v464
    %501 = vmatprep.subr.mxu0 0.0
    %502 = vmatpush1.msra.mxu0 %v465
    %503 = vmatprep.subr.mxu0 0.0
    %504 = vmatpush1.msra.mxu0 %v466
    %505 = vmatprep.subr.mxu0 0.0
    %506 = vmatpush1.msra.mxu0 %v467
    %507 = vmatprep.subr.mxu0 0.0
    %508 = vmatpush1.msra.mxu0 0.0
    %509 = vmatprep.subr.mxu0 0.0
    %510 = vmatpush1.msra.mxu0 0.0
    %511 = vmatprep.subr.mxu0 0.0
    %512 = vmatpush1.msra.mxu0 0.0
    %513 = vmatprep.subr.mxu0 0.0
    %514 = vmatpush1.msra.mxu0 0.0
    %515 = vmatprep.subr.mxu0 0.0
    %516 = vmatpush1.msra.mxu0 0.0
    %517 = vmatprep.subr.mxu0 0.0
    %518 = vmatpush1.msra.mxu0 0.0
    %519 = vmatprep.subr.mxu0 0.0
    %520 = vmatpush1.msra.mxu0 0.0
    %521 = vmatprep.subr.mxu0 0.0
    %522 = vmatpush1.msra.mxu0 0.0
    %523 = vmatprep.subr.mxu0 0.0
    %524 = vmatpush1.msra.mxu0 0.0
    %525 = vmatprep.subr.mxu0 0.0
    %526 = vmatpush1.msra.mxu0 0.0
    %527 = vmatprep.subr.mxu0 0.0
    %528 = vmatpush1.msra.mxu0 0.0
    %529 = vmatprep.subr.mxu0 0.0
    %530 = vmatpush1.msra.mxu0 0.0
    %531 = vmatprep.subr.mxu0 0.0
    %532 = vmatpush1.msra.mxu0 0.0
    %533 = vmatprep.subr.mxu0 0.0
    %534 = vmatpush1.msra.mxu0 0.0
    %535 = vmatprep.subr.mxu0 0.0
    %536 = vmatpush1.msra.mxu0 0.0
    %537 = vmatprep.subr.mxu0 0.0
    %538 = vmatpush1.msra.mxu0 0.0
    %539 = vmatprep.mubr.f32.mxu0 0.0
    %540 = vmatmul.mubr.f32.gmra.mrb[0].mxu0 %v451
    %v541 = vpop.f32.mrb[0].mxu0
    %v542 = vadd.f32 %v473, %v541
    %v543 = vpop.f32.mrb[0].mxu0
    %544 = vdwg.mxu0
    %v545 = vmax.f32 %v542, 0.0
    %v546 = vld [vmem:[#allocation7] sm:$0xff]
    %v547 = vld [vmem:[#allocation7 + $0x8] sm:$0xff]
    %v548 = vld [vmem:[#allocation7 + $0x10] sm:$0xff]
    %v549 = vld [vmem:[#allocation7 + $0x18] sm:$0xff]
    %v550 = vld [vmem:[#allocation7 + $0x20] sm:$0xff]
    %v551 = vld [vmem:[#allocation7 + $0x28] sm:$0xff]
    %v552 = vld [vmem:[#allocation7 + $0x30] sm:$0xff]
    %v553 = vld [vmem:[#allocation7 + $0x38] sm:$0xff]
    %v554 = vld [vmem:[#allocation7 + $0x40] sm:$0xff]
    %v555 = vld [vmem:[#allocation7 + $0x48] sm:$0xff]
    %v556 = vld [vmem:[#allocation7 + $0x50] sm:$0xff]
    %v557 = vld [vmem:[#allocation7 + $0x58] sm:$0xff]
    %v558 = vld [vmem:[#allocation7 + $0x60] sm:$0xff]
    %v559 = vld [vmem:[#allocation7 + $0x68] sm:$0xff]
    %v560 = vld [vmem:[#allocation7 + $0x70] sm:$0xff]
    %v561 = vld [vmem:[#allocation7 + $0x78] sm:$0xff]
    %v562 = vld [vmem:[%s10] sm:$0x1]
    %v564 = vlaneseq
    %v565 = vshrl.u32 %v564, 7
    %v566 = vsub.s32 0, %v565
    %v567 = vrot.slane %v562, %v566
    %569 = vmatprep.subr.mxu0 0.0
    %570 = vmatpush1.msra.mxu0 %v546
    %571 = vmatprep.subr.mxu0 0.0
    %572 = vmatpush1.msra.mxu0 %v547
    %573 = vmatprep.subr.mxu0 0.0
    %574 = vmatpush1.msra.mxu0 %v548
    %575 = vmatprep.subr.mxu0 0.0
    %576 = vmatpush1.msra.mxu0 %v549
    %577 = vmatprep.subr.mxu0 0.0
    %578 = vmatpush1.msra.mxu0 %v550
    %579 = vmatprep.subr.mxu0 0.0
    %580 = vmatpush1.msra.mxu0 %v551
    %581 = vmatprep.subr.mxu0 0.0
    %582 = vmatpush1.msra.mxu0 %v552
    %583 = vmatprep.subr.mxu0 0.0
    %584 = vmatpush1.msra.mxu0 %v553
    %585 = vmatprep.subr.mxu0 0.0
    %586 = vmatpush1.msra.mxu0 %v554
    %587 = vmatprep.subr.mxu0 0.0
    %588 = vmatpush1.msra.mxu0 %v555
    %589 = vmatprep.subr.mxu0 0.0
    %590 = vmatpush1.msra.mxu0 %v556
    %591 = vmatprep.subr.mxu0 0.0
    %592 = vmatpush1.msra.mxu0 %v557
    %593 = vmatprep.subr.mxu0 0.0
    %594 = vmatpush1.msra.mxu0 %v558
    %595 = vmatprep.subr.mxu0 0.0
    %596 = vmatpush1.msra.mxu0 %v559
    %597 = vmatprep.subr.mxu0 0.0
    %598 = vmatpush1.msra.mxu0 %v560
    %599 = vmatprep.subr.mxu0 0.0
    %600 = vmatpush1.msra.mxu0 %v561
    %601 = vmatprep.subr.mxu0 0.0
    %602 = vmatpush1.msra.mxu0 0.0
    %603 = vmatprep.subr.mxu0 0.0
    %604 = vmatpush1.msra.mxu0 0.0
    %605 = vmatprep.subr.mxu0 0.0
    %606 = vmatpush1.msra.mxu0 0.0
    %607 = vmatprep.subr.mxu0 0.0
    %608 = vmatpush1.msra.mxu0 0.0
    %609 = vmatprep.subr.mxu0 0.0
    %610 = vmatpush1.msra.mxu0 0.0
    %611 = vmatprep.subr.mxu0 0.0
    %612 = vmatpush1.msra.mxu0 0.0
    %613 = vmatprep.subr.mxu0 0.0
    %614 = vmatpush1.msra.mxu0 0.0
    %615 = vmatprep.subr.mxu0 0.0
    %616 = vmatpush1.msra.mxu0 0.0
    %617 = vmatprep.subr.mxu0 0.0
    %618 = vmatpush1.msra.mxu0 0.0
    %619 = vmatprep.subr.mxu0 0.0
    %620 = vmatpush1.msra.mxu0 0.0
    %621 = vmatprep.subr.mxu0 0.0
    %622 = vmatpush1.msra.mxu0 0.0
    %623 = vmatprep.subr.mxu0 0.0
    %624 = vmatpush1.msra.mxu0 0.0
    %625 = vmatprep.subr.mxu0 0.0
    %626 = vmatpush1.msra.mxu0 0.0
    %627 = vmatprep.subr.mxu0 0.0
    %628 = vmatpush1.msra.mxu0 0.0
    %629 = vmatprep.subr.mxu0 0.0
    %630 = vmatpush1.msra.mxu0 0.0
    %631 = vmatprep.subr.mxu0 0.0
    %632 = vmatpush1.msra.mxu0 0.0
    %633 = vmatprep.mubr.f32.mxu0 0.0
    %634 = vmatmul.mubr.f32.gmra.mrb[0].mxu0 %v545
    %v635 = vpop.f32.mrb[0].mxu0
    %v636 = vadd.f32 %v567, %v635
    %v637 = vpop.f32.mrb[0].mxu0
    %638 = vdwg.mxu0
    %v639 = vld [vmem:[#allocation8] sm:$0xff]
    %v640 = vld [vmem:[#allocation8 + $0x8] sm:$0xff]
    %v641 = vld [vmem:[#allocation8 + $0x10] sm:$0xff]
    %v642 = vld [vmem:[#allocation8 + $0x18] sm:$0xff]
    %v643 = vld [vmem:[#allocation8 + $0x20] sm:$0xff]
    %v644 = vld [vmem:[#allocation8 + $0x28] sm:$0xff]
    %v645 = vld [vmem:[#allocation8 + $0x30] sm:$0xff]
    %v646 = vld [vmem:[#allocation8 + $0x38] sm:$0xff]
    %v647 = vld [vmem:[#allocation8 + $0x40] sm:$0xff]
    %v648 = vld [vmem:[#allocation8 + $0x48] sm:$0xff]
    %v649 = vld [vmem:[#allocation8 + $0x50] sm:$0xff]
    %v650 = vld [vmem:[#allocation8 + $0x58] sm:$0xff]
    %v651 = vld [vmem:[#allocation8 + $0x60] sm:$0xff]
    %v652 = vld [vmem:[#allocation8 + $0x68] sm:$0xff]
    %v653 = vld [vmem:[#allocation8 + $0x70] sm:$0xff]
    %v654 = vld [vmem:[#allocation8 + $0x78] sm:$0xff]
    %v655 = vld [vmem:[%s14] sm:$0x1]
    %v657 = vlaneseq
    %v658 = vshrl.u32 %v657, 7
    %v659 = vsub.s32 0, %v658
    %v660 = vrot.slane %v655, %v659
    %662 = vmatprep.subr.mxu0 0.0
    %663 = vmatpush1.msra.mxu0 %v639
    %664 = vmatprep.subr.mxu0 0.0
    %665 = vmatpush1.msra.mxu0 %v640
    %666 = vmatprep.subr.mxu0 0.0
    %667 = vmatpush1.msra.mxu0 %v641
    %668 = vmatprep.subr.mxu0 0.0
    %669 = vmatpush1.msra.mxu0 %v642
    %670 = vmatprep.subr.mxu0 0.0
    %671 = vmatpush1.msra.mxu0 %v643
    %672 = vmatprep.subr.mxu0 0.0
    %673 = vmatpush1.msra.mxu0 %v644
    %674 = vmatprep.subr.mxu0 0.0
    %675 = vmatpush1.msra.mxu0 %v645
    %676 = vmatprep.subr.mxu0 0.0
    %677 = vmatpush1.msra.mxu0 %v646
    %678 = vmatprep.subr.mxu0 0.0
    %679 = vmatpush1.msra.mxu0 %v647
    %680 = vmatprep.subr.mxu0 0.0
    %681 = vmatpush1.msra.mxu0 %v648
    %682 = vmatprep.subr.mxu0 0.0
    %683 = vmatpush1.msra.mxu0 %v649
    %684 = vmatprep.subr.mxu0 0.0
    %685 = vmatpush1.msra.mxu0 %v650
    %686 = vmatprep.subr.mxu0 0.0
    %687 = vmatpush1.msra.mxu0 %v651
    %688 = vmatprep.subr.mxu0 0.0
    %689 = vmatpush1.msra.mxu0 %v652
    %690 = vmatprep.subr.mxu0 0.0
    %691 = vmatpush1.msra.mxu0 %v653
    %692 = vmatprep.subr.mxu0 0.0
    %693 = vmatpush1.msra.mxu0 %v654
    %694 = vmatprep.subr.mxu0 0.0
    %695 = vmatpush1.msra.mxu0 0.0
    %696 = vmatprep.subr.mxu0 0.0
    %697 = vmatpush1.msra.mxu0 0.0
    %698 = vmatprep.subr.mxu0 0.0
    %699 = vmatpush1.msra.mxu0 0.0
    %700 = vmatprep.subr.mxu0 0.0
    %701 = vmatpush1.msra.mxu0 0.0
    %702 = vmatprep.subr.mxu0 0.0
    %703 = vmatpush1.msra.mxu0 0.0
    %704 = vmatprep.subr.mxu0 0.0
    %705 = vmatpush1.msra.mxu0 0.0
    %706 = vmatprep.subr.mxu0 0.0
    %707 = vmatpush1.msra.mxu0 0.0
    %708 = vmatprep.subr.mxu0 0.0
    %709 = vmatpush1.msra.mxu0 0.0
    %710 = vmatprep.subr.mxu0 0.0
    %711 = vmatpush1.msra.mxu0 0.0
    %712 = vmatprep.subr.mxu0 0.0
    %713 = vmatpush1.msra.mxu0 0.0
    %714 = vmatprep.subr.mxu0 0.0
    %715 = vmatpush1.msra.mxu0 0.0
    %716 = vmatprep.subr.mxu0 0.0
    %717 = vmatpush1.msra.mxu0 0.0
    %718 = vmatprep.subr.mxu0 0.0
    %719 = vmatpush1.msra.mxu0 0.0
    %720 = vmatprep.subr.mxu0 0.0
    %721 = vmatpush1.msra.mxu0 0.0
    %722 = vmatprep.subr.mxu0 0.0
    %723 = vmatpush1.msra.mxu0 0.0
    %724 = vmatprep.subr.mxu0 0.0
    %725 = vmatpush1.msra.mxu0 0.0
    %726 = vmatprep.mubr.f32.mxu0 0.0
    %727 = vmatmul.mubr.f32.gmra.mrb[0].mxu0 %v357
    %v728 = vpop.f32.mrb[0].mxu0
    %v729 = vadd.f32 %v660, %v728
    %v730 = vpop.f32.mrb[0].mxu0
    %731 = vdwg.mxu0
    %v732 = vmax.f32 %v729, 0.0
    %v733 = vld [vmem:[#allocation10] sm:$0xff]
    %v734 = vld [vmem:[#allocation10 + $0x8] sm:$0xff]
    %v735 = vld [vmem:[#allocation10 + $0x10] sm:$0xff]
    %v736 = vld [vmem:[#allocation10 + $0x18] sm:$0xff]
    %v737 = vld [vmem:[#allocation10 + $0x20] sm:$0xff]
    %v738 = vld [vmem:[#allocation10 + $0x28] sm:$0xff]
    %v739 = vld [vmem:[#allocation10 + $0x30] sm:$0xff]
    %v740 = vld [vmem:[#allocation10 + $0x38] sm:$0xff]
    %v741 = vld [vmem:[#allocation10 + $0x40] sm:$0xff]
    %v742 = vld [vmem:[#allocation10 + $0x48] sm:$0xff]
    %v743 = vld [vmem:[#allocation10 + $0x50] sm:$0xff]
    %v744 = vld [vmem:[#allocation10 + $0x58] sm:$0xff]
    %v745 = vld [vmem:[#allocation10 + $0x60] sm:$0xff]
    %v746 = vld [vmem:[#allocation10 + $0x68] sm:$0xff]
    %v747 = vld [vmem:[#allocation10 + $0x70] sm:$0xff]
    %v748 = vld [vmem:[#allocation10 + $0x78] sm:$0xff]
    %v749 = vld [vmem:[%s15] sm:$0x1]
    %v751 = vlaneseq
    %v752 = vshrl.u32 %v751, 7
    %v753 = vsub.s32 0, %v752
    %v754 = vrot.slane %v749, %v753
    %756 = vmatprep.subr.mxu0 0.0
    %757 = vmatpush1.msra.mxu0 %v733
    %758 = vmatprep.subr.mxu0 0.0
    %759 = vmatpush1.msra.mxu0 %v734
    %760 = vmatprep.subr.mxu0 0.0
    %761 = vmatpush1.msra.mxu0 %v735
    %762 = vmatprep.subr.mxu0 0.0
    %763 = vmatpush1.msra.mxu0 %v736
    %764 = vmatprep.subr.mxu0 0.0
    %765 = vmatpush1.msra.mxu0 %v737
    %766 = vmatprep.subr.mxu0 0.0
    %767 = vmatpush1.msra.mxu0 %v738
    %768 = vmatprep.subr.mxu0 0.0
    %769 = vmatpush1.msra.mxu0 %v739
    %770 = vmatprep.subr.mxu0 0.0
    %771 = vmatpush1.msra.mxu0 %v740
    %772 = vmatprep.subr.mxu0 0.0
    %773 = vmatpush1.msra.mxu0 %v741
    %774 = vmatprep.subr.mxu0 0.0
    %775 = vmatpush1.msra.mxu0 %v742
    %776 = vmatprep.subr.mxu0 0.0
    %777 = vmatpush1.msra.mxu0 %v743
    %778 = vmatprep.subr.mxu0 0.0
    %779 = vmatpush1.msra.mxu0 %v744
    %780 = vmatprep.subr.mxu0 0.0
    %781 = vmatpush1.msra.mxu0 %v745
    %782 = vmatprep.subr.mxu0 0.0
    %783 = vmatpush1.msra.mxu0 %v746
    %784 = vmatprep.subr.mxu0 0.0
    %785 = vmatpush1.msra.mxu0 %v747
    %786 = vmatprep.subr.mxu0 0.0
    %787 = vmatpush1.msra.mxu0 %v748
    %788 = vmatprep.subr.mxu0 0.0
    %789 = vmatpush1.msra.mxu0 0.0
    %790 = vmatprep.subr.mxu0 0.0
    %791 = vmatpush1.msra.mxu0 0.0
    %792 = vmatprep.subr.mxu0 0.0
    %793 = vmatpush1.msra.mxu0 0.0
    %794 = vmatprep.subr.mxu0 0.0
    %795 = vmatpush1.msra.mxu0 0.0
    %796 = vmatprep.subr.mxu0 0.0
    %797 = vmatpush1.msra.mxu0 0.0
    %798 = vmatprep.subr.mxu0 0.0
    %799 = vmatpush1.msra.mxu0 0.0
    %800 = vmatprep.subr.mxu0 0.0
    %801 = vmatpush1.msra.mxu0 0.0
    %802 = vmatprep.subr.mxu0 0.0
    %803 = vmatpush1.msra.mxu0 0.0
    %804 = vmatprep.subr.mxu0 0.0
    %805 = vmatpush1.msra.mxu0 0.0
    %806 = vmatprep.subr.mxu0 0.0
    %807 = vmatpush1.msra.mxu0 0.0
    %808 = vmatprep.subr.mxu0 0.0
    %809 = vmatpush1.msra.mxu0 0.0
    %810 = vmatprep.subr.mxu0 0.0
    %811 = vmatpush1.msra.mxu0 0.0
    %812 = vmatprep.subr.mxu0 0.0
    %813 = vmatpush1.msra.mxu0 0.0
    %814 = vmatprep.subr.mxu0 0.0
    %815 = vmatpush1.msra.mxu0 0.0
    %816 = vmatprep.subr.mxu0 0.0
    %817 = vmatpush1.msra.mxu0 0.0
    %818 = vmatprep.subr.mxu0 0.0
    %819 = vmatpush1.msra.mxu0 0.0
    %820 = vmatprep.mubr.f32.mxu0 0.0
    %821 = vmatmul.mubr.f32.gmra.mrb[0].mxu0 %v732
    %v822 = vpop.f32.mrb[0].mxu0
    %v823 = vadd.f32 %v754, %v822
    %v824 = vpop.f32.mrb[0].mxu0
    %825 = vdwg.mxu0
    %v826 = vmax.f32 %v823, 0.0
    %v827 = vld [vmem:[#allocation11] sm:$0xff]
    %v828 = vld [vmem:[#allocation11 + $0x8] sm:$0xff]
    %v829 = vld [vmem:[#allocation11 + $0x10] sm:$0xff]
    %v830 = vld [vmem:[#allocation11 + $0x18] sm:$0xff]
    %v831 = vld [vmem:[#allocation11 + $0x20] sm:$0xff]
    %v832 = vld [vmem:[#allocation11 + $0x28] sm:$0xff]
    %v833 = vld [vmem:[#allocation11 + $0x30] sm:$0xff]
    %v834 = vld [vmem:[#allocation11 + $0x38] sm:$0xff]
    %v835 = vld [vmem:[#allocation11 + $0x40] sm:$0xff]
    %v836 = vld [vmem:[#allocation11 + $0x48] sm:$0xff]
    %v837 = vld [vmem:[#allocation11 + $0x50] sm:$0xff]
    %v838 = vld [vmem:[#allocation11 + $0x58] sm:$0xff]
    %v839 = vld [vmem:[#allocation11 + $0x60] sm:$0xff]
    %v840 = vld [vmem:[#allocation11 + $0x68] sm:$0xff]
    %v841 = vld [vmem:[#allocation11 + $0x70] sm:$0xff]
    %v842 = vld [vmem:[#allocation11 + $0x78] sm:$0xff]
    %v843 = vld [vmem:[%s16] sm:$0x1]
    %v845 = vlaneseq
    %v846 = vshrl.u32 %v845, 7
    %v847 = vsub.s32 0, %v846
    %v848 = vrot.slane %v843, %v847
    %850 = vmatprep.subr.mxu0 0.0
    %851 = vmatpush1.msra.mxu0 %v827
    %852 = vmatprep.subr.mxu0 0.0
    %853 = vmatpush1.msra.mxu0 %v828
    %854 = vmatprep.subr.mxu0 0.0
    %855 = vmatpush1.msra.mxu0 %v829
    %856 = vmatprep.subr.mxu0 0.0
    %857 = vmatpush1.msra.mxu0 %v830
    %858 = vmatprep.subr.mxu0 0.0
    %859 = vmatpush1.msra.mxu0 %v831
    %860 = vmatprep.subr.mxu0 0.0
    %861 = vmatpush1.msra.mxu0 %v832
    %862 = vmatprep.subr.mxu0 0.0
    %863 = vmatpush1.msra.mxu0 %v833
    %864 = vmatprep.subr.mxu0 0.0
    %865 = vmatpush1.msra.mxu0 %v834
    %866 = vmatprep.subr.mxu0 0.0
    %867 = vmatpush1.msra.mxu0 %v835
    %868 = vmatprep.subr.mxu0 0.0
    %869 = vmatpush1.msra.mxu0 %v836
    %870 = vmatprep.subr.mxu0 0.0
    %871 = vmatpush1.msra.mxu0 %v837
    %872 = vmatprep.subr.mxu0 0.0
    %873 = vmatpush1.msra.mxu0 %v838
    %874 = vmatprep.subr.mxu0 0.0
    %875 = vmatpush1.msra.mxu0 %v839
    %876 = vmatprep.subr.mxu0 0.0
    %877 = vmatpush1.msra.mxu0 %v840
    %878 = vmatprep.subr.mxu0 0.0
    %879 = vmatpush1.msra.mxu0 %v841
    %880 = vmatprep.subr.mxu0 0.0
    %881 = vmatpush1.msra.mxu0 %v842
    %882 = vmatprep.subr.mxu0 0.0
    %883 = vmatpush1.msra.mxu0 0.0
    %884 = vmatprep.subr.mxu0 0.0
    %885 = vmatpush1.msra.mxu0 0.0
    %886 = vmatprep.subr.mxu0 0.0
    %887 = vmatpush1.msra.mxu0 0.0
    %888 = vmatprep.subr.mxu0 0.0
    %889 = vmatpush1.msra.mxu0 0.0
    %890 = vmatprep.subr.mxu0 0.0
    %891 = vmatpush1.msra.mxu0 0.0
    %892 = vmatprep.subr.mxu0 0.0
    %893 = vmatpush1.msra.mxu0 0.0
    %894 = vmatprep.subr.mxu0 0.0
    %895 = vmatpush1.msra.mxu0 0.0
    %896 = vmatprep.subr.mxu0 0.0
    %897 = vmatpush1.msra.mxu0 0.0
    %898 = vmatprep.subr.mxu0 0.0
    %899 = vmatpush1.msra.mxu0 0.0
    %900 = vmatprep.subr.mxu0 0.0
    %901 = vmatpush1.msra.mxu0 0.0
    %902 = vmatprep.subr.mxu0 0.0
    %903 = vmatpush1.msra.mxu0 0.0
    %904 = vmatprep.subr.mxu0 0.0
    %905 = vmatpush1.msra.mxu0 0.0
    %906 = vmatprep.subr.mxu0 0.0
    %907 = vmatpush1.msra.mxu0 0.0
    %908 = vmatprep.subr.mxu0 0.0
    %909 = vmatpush1.msra.mxu0 0.0
    %910 = vmatprep.subr.mxu0 0.0
    %911 = vmatpush1.msra.mxu0 0.0
    %912 = vmatprep.subr.mxu0 0.0
    %913 = vmatpush1.msra.mxu0 0.0
    %914 = vmatprep.mubr.f32.mxu0 0.0
    %915 = vmatmul.mubr.f32.gmra.mrb[0].mxu0 %v826
    %v916 = vpop.f32.mrb[0].mxu0
    %v917 = vadd.f32 %v848, %v916
    %v918 = vpop.f32.mrb[0].mxu0
    %919 = vdwg.mxu0
    %v920 = vld [vmem:[%s2] sm:$0x3]
    %vm921 = vcmask 64512
    %v923 = vsel %vm921, %v920, 0
    %925 = vmatprep.subr.mxu0 0.0
    %926 = vmatpush1.msra.mxu0 %v636
    %927 = vmatprep.subr.mxu0 0.0
    %928 = vmatpush1.msra.mxu0 0.0
    %929 = vmatprep.subr.mxu0 0.0
    %930 = vmatpush1.msra.mxu0 0.0
    %931 = vmatprep.subr.mxu0 0.0
    %932 = vmatpush1.msra.mxu0 0.0
    %933 = vmatprep.subr.mxu0 0.0
    %934 = vmatpush1.msra.mxu0 0.0
    %935 = vmatprep.subr.mxu0 0.0
    %936 = vmatpush1.msra.mxu0 0.0
    %937 = vmatprep.subr.mxu0 0.0
    %938 = vmatpush1.msra.mxu0 0.0
    %939 = vmatprep.subr.mxu0 0.0
    %940 = vmatpush1.msra.mxu0 0.0
    %941 = vmatprep.subr.mxu0 0.0
    %942 = vmatpush1.msra.mxu0 0.0
    %943 = vmatprep.subr.mxu0 0.0
    %944 = vmatpush1.msra.mxu0 0.0
    %945 = vmatprep.subr.mxu0 0.0
    %946 = vmatpush1.msra.mxu0 0.0
    %947 = vmatprep.subr.mxu0 0.0
    %948 = vmatpush1.msra.mxu0 0.0
    %949 = vmatprep.subr.mxu0 0.0
    %950 = vmatpush1.msra.mxu0 0.0
    %951 = vmatprep.subr.mxu0 0.0
    %952 = vmatpush1.msra.mxu0 0.0
    %953 = vmatprep.subr.mxu0 0.0
    %954 = vmatpush1.msra.mxu0 0.0
    %955 = vmatprep.subr.mxu0 0.0
    %956 = vmatpush1.msra.mxu0 0.0
    %957 = vmatprep.subr.mxu0 0.0
    %958 = vmatpush1.msra.mxu0 0.0
    %959 = vmatprep.subr.mxu0 0.0
    %960 = vmatpush1.msra.mxu0 0.0
    %961 = vmatprep.subr.mxu0 0.0
    %962 = vmatpush1.msra.mxu0 0.0
    %963 = vmatprep.subr.mxu0 0.0
    %964 = vmatpush1.msra.mxu0 0.0
    %965 = vmatprep.subr.mxu0 0.0
    %966 = vmatpush1.msra.mxu0 0.0
    %967 = vmatprep.subr.mxu0 0.0
    %968 = vmatpush1.msra.mxu0 0.0
    %969 = vmatprep.subr.mxu0 0.0
    %970 = vmatpush1.msra.mxu0 0.0
    %971 = vmatprep.subr.mxu0 0.0
    %972 = vmatpush1.msra.mxu0 0.0
    %973 = vmatprep.subr.mxu0 0.0
    %974 = vmatpush1.msra.mxu0 0.0
    %975 = vmatprep.subr.mxu0 0.0
    %976 = vmatpush1.msra.mxu0 0.0
    %977 = vmatprep.subr.mxu0 0.0
    %978 = vmatpush1.msra.mxu0 0.0
    %979 = vmatprep.subr.mxu0 0.0
    %980 = vmatpush1.msra.mxu0 0.0
    %981 = vmatprep.subr.mxu0 0.0
    %982 = vmatpush1.msra.mxu0 0.0
    %983 = vmatprep.subr.mxu0 0.0
    %984 = vmatpush1.msra.mxu0 0.0
    %985 = vmatprep.subr.mxu0 0.0
    %986 = vmatpush1.msra.mxu0 0.0
    %987 = vmatprep.subr.mxu0 0.0
    %988 = vmatpush1.msra.mxu0 0.0
    %989 = vmatprep.mubr.f32.mxu0 0.0
    %990 = vmatmul.mubr.f32.gmra.mrb[0].mxu0 %v923
    %v991 = vpop.f32.mrb[0].mxu0
    %v992 = vadd.f32 0.0, %v991
    %v993 = vpop.f32.mrb[0].mxu0
    %994 = vdwg.mxu0
    %995 = vmatprep.subr.mxu0 0.0
    %996 = vmatpush1.msra.mxu0 %v917
    %997 = vmatprep.subr.mxu0 0.0
    %998 = vmatpush1.msra.mxu0 0.0
    %999 = vmatprep.subr.mxu0 0.0
    %1000 = vmatpush1.msra.mxu0 0.0
    %1001 = vmatprep.subr.mxu0 0.0
    %1002 = vmatpush1.msra.mxu0 0.0
    %1003 = vmatprep.subr.mxu0 0.0
    %1004 = vmatpush1.msra.mxu0 0.0
    %1005 = vmatprep.subr.mxu0 0.0
    %1006 = vmatpush1.msra.mxu0 0.0
    %1007 = vmatprep.subr.mxu0 0.0
    %1008 = vmatpush1.msra.mxu0 0.0
    %1009 = vmatprep.subr.mxu0 0.0
    %1010 = vmatpush1.msra.mxu0 0.0
    %1011 = vmatprep.subr.mxu0 0.0
    %1012 = vmatpush1.msra.mxu0 0.0
    %1013 = vmatprep.subr.mxu0 0.0
    %1014 = vmatpush1.msra.mxu0 0.0
    %1015 = vmatprep.subr.mxu0 0.0
    %1016 = vmatpush1.msra.mxu0 0.0
    %1017 = vmatprep.subr.mxu0 0.0
    %1018 = vmatpush1.msra.mxu0 0.0
    %1019 = vmatprep.subr.mxu0 0.0
    %1020 = vmatpush1.msra.mxu0 0.0
    %1021 = vmatprep.subr.mxu0 0.0
    %1022 = vmatpush1.msra.mxu0 0.0
    %1023 = vmatprep.subr.mxu0 0.0
    %1024 = vmatpush1.msra.mxu0 0.0
    %1025 = vmatprep.subr.mxu0 0.0
    %1026 = vmatpush1.msra.mxu0 0.0
    %1027 = vmatprep.subr.mxu0 0.0
    %1028 = vmatpush1.msra.mxu0 0.0
    %1029 = vmatprep.subr.mxu0 0.0
    %1030 = vmatpush1.msra.mxu0 0.0
    %1031 = vmatprep.subr.mxu0 0.0
    %1032 = vmatpush1.msra.mxu0 0.0
    %1033 = vmatprep.subr.mxu0 0.0
    %1034 = vmatpush1.msra.mxu0 0.0
    %1035 = vmatprep.subr.mxu0 0.0
    %1036 = vmatpush1.msra.mxu0 0.0
    %1037 = vmatprep.subr.mxu0 0.0
    %1038 = vmatpush1.msra.mxu0 0.0
    %1039 = vmatprep.subr.mxu0 0.0
    %1040 = vmatpush1.msra.mxu0 0.0
    %1041 = vmatprep.subr.mxu0 0.0
    %1042 = vmatpush1.msra.mxu0 0.0
    %1043 = vmatprep.subr.mxu0 0.0
    %1044 = vmatpush1.msra.mxu0 0.0
    %1045 = vmatprep.subr.mxu0 0.0
    %1046 = vmatpush1.msra.mxu0 0.0
    %1047 = vmatprep.subr.mxu0 0.0
    %1048 = vmatpush1.msra.mxu0 0.0
    %1049 = vmatprep.subr.mxu0 0.0
    %1050 = vmatpush1.msra.mxu0 0.0
    %1051 = vmatprep.subr.mxu0 0.0
    %1052 = vmatpush1.msra.mxu0 0.0
    %1053 = vmatprep.subr.mxu0 0.0
    %1054 = vmatpush1.msra.mxu0 0.0
    %1055 = vmatprep.subr.mxu0 0.0
    %1056 = vmatpush1.msra.mxu0 0.0
    %1057 = vmatprep.subr.mxu0 0.0
    %1058 = vmatpush1.msra.mxu0 0.0
    %1059 = vmatprep.mubr.f32.mxu0 0.0
    %1060 = vmatmul.mubr.f32.gmra.mrb[0].mxu0 %v923
    %v1061 = vpop.f32.mrb[0].mxu0
    %v1062 = vadd.f32 0.0, %v1061
    %v1063 = vpop.f32.mrb[0].mxu0
    %1064 = vdwg.mxu0
    %v1065 = vld [vmem:[#allocation13] sm:$0xff]
    %v1066 = vld [vmem:[#allocation13 + $0x8] sm:$0xff]
    %v1067 = vld [vmem:[#allocation13 + $0x10] sm:$0xff]
    %v1068 = vld [vmem:[#allocation13 + $0x18] sm:$0xff]
    %v1069 = vld [vmem:[#allocation13 + $0x20] sm:$0xff]
    %v1070 = vld [vmem:[#allocation13 + $0x28] sm:$0xff]
    %v1071 = vld [vmem:[#allocation13 + $0x30] sm:$0xff]
    %v1072 = vld [vmem:[#allocation13 + $0x38] sm:$0xff]
    %v1073 = vld [vmem:[#allocation13 + $0x40] sm:$0xff]
    %v1074 = vld [vmem:[#allocation13 + $0x48] sm:$0xff]
    %v1075 = vld [vmem:[#allocation13 + $0x50] sm:$0xff]
    %v1076 = vld [vmem:[#allocation13 + $0x58] sm:$0xff]
    %v1077 = vld [vmem:[#allocation13 + $0x60] sm:$0xff]
    %v1078 = vld [vmem:[#allocation13 + $0x68] sm:$0xff]
    %v1079 = vld [vmem:[#allocation13 + $0x70] sm:$0xff]
    %v1080 = vld [vmem:[#allocation13 + $0x78] sm:$0xff]
    %v1081 = vld [vmem:[%s19] sm:$0x1]
    %v1083 = vlaneseq
    %v1084 = vshrl.u32 %v1083, 7
    %v1085 = vsub.s32 0, %v1084
    %v1086 = vrot.slane %v1081, %v1085
    %1088 = vmatprep.subr.mxu0 0.0
    %1089 = vmatpush1.msra.mxu0 %v1065
    %1090 = vmatprep.subr.mxu0 0.0
    %1091 = vmatpush1.msra.mxu0 %v1066
    %1092 = vmatprep.subr.mxu0 0.0
    %1093 = vmatpush1.msra.mxu0 %v1067
    %1094 = vmatprep.subr.mxu0 0.0
    %1095 = vmatpush1.msra.mxu0 %v1068
    %1096 = vmatprep.subr.mxu0 0.0
    %1097 = vmatpush1.msra.mxu0 %v1069
    %1098 = vmatprep.subr.mxu0 0.0
    %1099 = vmatpush1.msra.mxu0 %v1070
    %1100 = vmatprep.subr.mxu0 0.0
    %1101 = vmatpush1.msra.mxu0 %v1071
    %1102 = vmatprep.subr.mxu0 0.0
    %1103 = vmatpush1.msra.mxu0 %v1072
    %1104 = vmatprep.subr.mxu0 0.0
    %1105 = vmatpush1.msra.mxu0 %v1073
    %1106 = vmatprep.subr.mxu0 0.0
    %1107 = vmatpush1.msra.mxu0 %v1074
    %1108 = vmatprep.subr.mxu0 0.0
    %1109 = vmatpush1.msra.mxu0 %v1075
    %1110 = vmatprep.subr.mxu0 0.0
    %1111 = vmatpush1.msra.mxu0 %v1076
    %1112 = vmatprep.subr.mxu0 0.0
    %1113 = vmatpush1.msra.mxu0 %v1077
    %1114 = vmatprep.subr.mxu0 0.0
    %1115 = vmatpush1.msra.mxu0 %v1078
    %1116 = vmatprep.subr.mxu0 0.0
    %1117 = vmatpush1.msra.mxu0 %v1079
    %1118 = vmatprep.subr.mxu0 0.0
    %1119 = vmatpush1.msra.mxu0 %v1080
    %1120 = vmatprep.subr.mxu0 0.0
    %1121 = vmatpush1.msra.mxu0 0.0
    %1122 = vmatprep.subr.mxu0 0.0
    %1123 = vmatpush1.msra.mxu0 0.0
    %1124 = vmatprep.subr.mxu0 0.0
    %1125 = vmatpush1.msra.mxu0 0.0
    %1126 = vmatprep.subr.mxu0 0.0
    %1127 = vmatpush1.msra.mxu0 0.0
    %1128 = vmatprep.subr.mxu0 0.0
    %1129 = vmatpush1.msra.mxu0 0.0
    %1130 = vmatprep.subr.mxu0 0.0
    %1131 = vmatpush1.msra.mxu0 0.0
    %1132 = vmatprep.subr.mxu0 0.0
    %1133 = vmatpush1.msra.mxu0 0.0
    %1134 = vmatprep.subr.mxu0 0.0
    %1135 = vmatpush1.msra.mxu0 0.0
    %1136 = vmatprep.subr.mxu0 0.0
    %1137 = vmatpush1.msra.mxu0 0.0
    %1138 = vmatprep.subr.mxu0 0.0
    %1139 = vmatpush1.msra.mxu0 0.0
    %1140 = vmatprep.subr.mxu0 0.0
    %1141 = vmatpush1.msra.mxu0 0.0
    %1142 = vmatprep.subr.mxu0 0.0
    %1143 = vmatpush1.msra.mxu0 0.0
    %1144 = vmatprep.subr.mxu0 0.0
    %1145 = vmatpush1.msra.mxu0 0.0
    %1146 = vmatprep.subr.mxu0 0.0
    %1147 = vmatpush1.msra.mxu0 0.0
    %1148 = vmatprep.subr.mxu0 0.0
    %1149 = vmatpush1.msra.mxu0 0.0
    %1150 = vmatprep.subr.mxu0 0.0
    %1151 = vmatpush1.msra.mxu0 0.0
    %1152 = vmatprep.mubr.f32.mxu0 0.0
    %1153 = vmatmul.mubr.f32.gmra.mrb[0].mxu0 %v992
    %v1154 = vpop.f32.mrb[0].mxu0
    %v1155 = vadd.f32 %v1086, %v1154
    %v1156 = vpop.f32.mrb[0].mxu0
    %1157 = vdwg.mxu0
    %v1158 = vmax.f32 %v1155, 0.0
    %v1159 = vld [vmem:[#allocation14] sm:$0xff]
    %v1160 = vld [vmem:[#allocation14 + $0x8] sm:$0xff]
    %v1161 = vld [vmem:[#allocation14 + $0x10] sm:$0xff]
    %v1162 = vld [vmem:[#allocation14 + $0x18] sm:$0xff]
    %v1163 = vld [vmem:[#allocation14 + $0x20] sm:$0xff]
    %v1164 = vld [vmem:[#allocation14 + $0x28] sm:$0xff]
    %v1165 = vld [vmem:[#allocation14 + $0x30] sm:$0xff]
    %v1166 = vld [vmem:[#allocation14 + $0x38] sm:$0xff]
    %v1167 = vld [vmem:[#allocation14 + $0x40] sm:$0xff]
    %v1168 = vld [vmem:[#allocation14 + $0x48] sm:$0xff]
    %v1169 = vld [vmem:[#allocation14 + $0x50] sm:$0xff]
    %v1170 = vld [vmem:[#allocation14 + $0x58] sm:$0xff]
    %v1171 = vld [vmem:[#allocation14 + $0x60] sm:$0xff]
    %v1172 = vld [vmem:[#allocation14 + $0x68] sm:$0xff]
    %v1173 = vld [vmem:[#allocation14 + $0x70] sm:$0xff]
    %v1174 = vld [vmem:[#allocation14 + $0x78] sm:$0xff]
    %v1175 = vld [vmem:[%s20] sm:$0x1]
    %v1177 = vlaneseq
    %v1178 = vshrl.u32 %v1177, 7
    %v1179 = vsub.s32 0, %v1178
    %v1180 = vrot.slane %v1175, %v1179
    %1182 = vmatprep.subr.mxu0 0.0
    %1183 = vmatpush1.msra.mxu0 %v1159
    %1184 = vmatprep.subr.mxu0 0.0
    %1185 = vmatpush1.msra.mxu0 %v1160
    %1186 = vmatprep.subr.mxu0 0.0
    %1187 = vmatpush1.msra.mxu0 %v1161
    %1188 = vmatprep.subr.mxu0 0.0
    %1189 = vmatpush1.msra.mxu0 %v1162
    %1190 = vmatprep.subr.mxu0 0.0
    %1191 = vmatpush1.msra.mxu0 %v1163
    %1192 = vmatprep.subr.mxu0 0.0
    %1193 = vmatpush1.msra.mxu0 %v1164
    %1194 = vmatprep.subr.mxu0 0.0
    %1195 = vmatpush1.msra.mxu0 %v1165
    %1196 = vmatprep.subr.mxu0 0.0
    %1197 = vmatpush1.msra.mxu0 %v1166
    %1198 = vmatprep.subr.mxu0 0.0
    %1199 = vmatpush1.msra.mxu0 %v1167
    %1200 = vmatprep.subr.mxu0 0.0
    %1201 = vmatpush1.msra.mxu0 %v1168
    %1202 = vmatprep.subr.mxu0 0.0
    %1203 = vmatpush1.msra.mxu0 %v1169
    %1204 = vmatprep.subr.mxu0 0.0
    %1205 = vmatpush1.msra.mxu0 %v1170
    %1206 = vmatprep.subr.mxu0 0.0
    %1207 = vmatpush1.msra.mxu0 %v1171
    %1208 = vmatprep.subr.mxu0 0.0
    %1209 = vmatpush1.msra.mxu0 %v1172
    %1210 = vmatprep.subr.mxu0 0.0
    %1211 = vmatpush1.msra.mxu0 %v1173
    %1212 = vmatprep.subr.mxu0 0.0
    %1213 = vmatpush1.msra.mxu0 %v1174
    %1214 = vmatprep.subr.mxu0 0.0
    %1215 = vmatpush1.msra.mxu0 0.0
    %1216 = vmatprep.subr.mxu0 0.0
    %1217 = vmatpush1.msra.mxu0 0.0
    %1218 = vmatprep.subr.mxu0 0.0
    %1219 = vmatpush1.msra.mxu0 0.0
    %1220 = vmatprep.subr.mxu0 0.0
    %1221 = vmatpush1.msra.mxu0 0.0
    %1222 = vmatprep.subr.mxu0 0.0
    %1223 = vmatpush1.msra.mxu0 0.0
    %1224 = vmatprep.subr.mxu0 0.0
    %1225 = vmatpush1.msra.mxu0 0.0
    %1226 = vmatprep.subr.mxu0 0.0
    %1227 = vmatpush1.msra.mxu0 0.0
    %1228 = vmatprep.subr.mxu0 0.0
    %1229 = vmatpush1.msra.mxu0 0.0
    %1230 = vmatprep.subr.mxu0 0.0
    %1231 = vmatpush1.msra.mxu0 0.0
    %1232 = vmatprep.subr.mxu0 0.0
    %1233 = vmatpush1.msra.mxu0 0.0
    %1234 = vmatprep.subr.mxu0 0.0
    %1235 = vmatpush1.msra.mxu0 0.0
    %1236 = vmatprep.subr.mxu0 0.0
    %1237 = vmatpush1.msra.mxu0 0.0
    %1238 = vmatprep.subr.mxu0 0.0
    %1239 = vmatpush1.msra.mxu0 0.0
    %1240 = vmatprep.subr.mxu0 0.0
    %1241 = vmatpush1.msra.mxu0 0.0
    %1242 = vmatprep.subr.mxu0 0.0
    %1243 = vmatpush1.msra.mxu0 0.0
    %1244 = vmatprep.subr.mxu0 0.0
    %1245 = vmatpush1.msra.mxu0 0.0
    %1246 = vmatprep.mubr.f32.mxu0 0.0
    %1247 = vmatmul.mubr.f32.gmra.mrb[0].mxu0 %v1158
    %v1248 = vpop.f32.mrb[0].mxu0
    %v1249 = vadd.f32 %v1180, %v1248
    %v1250 = vpop.f32.mrb[0].mxu0
    %1251 = vdwg.mxu0
    %v1252 = vld [vmem:[#allocation16] sm:$0xff]
    %v1253 = vld [vmem:[#allocation16 + $0x8] sm:$0xff]
    %v1254 = vld [vmem:[#allocation16 + $0x10] sm:$0xff]
    %v1255 = vld [vmem:[#allocation16 + $0x18] sm:$0xff]
    %v1256 = vld [vmem:[#allocation16 + $0x20] sm:$0xff]
    %v1257 = vld [vmem:[#allocation16 + $0x28] sm:$0xff]
    %v1258 = vld [vmem:[#allocation16 + $0x30] sm:$0xff]
    %v1259 = vld [vmem:[#allocation16 + $0x38] sm:$0xff]
    %v1260 = vld [vmem:[#allocation16 + $0x40] sm:$0xff]
    %v1261 = vld [vmem:[#allocation16 + $0x48] sm:$0xff]
    %v1262 = vld [vmem:[#allocation16 + $0x50] sm:$0xff]
    %v1263 = vld [vmem:[#allocation16 + $0x58] sm:$0xff]
    %v1264 = vld [vmem:[#allocation16 + $0x60] sm:$0xff]
    %v1265 = vld [vmem:[#allocation16 + $0x68] sm:$0xff]
    %v1266 = vld [vmem:[#allocation16 + $0x70] sm:$0xff]
    %v1267 = vld [vmem:[#allocation16 + $0x78] sm:$0xff]
    %v1268 = vld [vmem:[%s23] sm:$0x1]
    %v1270 = vlaneseq
    %v1271 = vshrl.u32 %v1270, 7
    %v1272 = vsub.s32 0, %v1271
    %v1273 = vrot.slane %v1268, %v1272
    %1275 = vmatprep.subr.mxu0 0.0
    %1276 = vmatpush1.msra.mxu0 %v1252
    %1277 = vmatprep.subr.mxu0 0.0
    %1278 = vmatpush1.msra.mxu0 %v1253
    %1279 = vmatprep.subr.mxu0 0.0
    %1280 = vmatpush1.msra.mxu0 %v1254
    %1281 = vmatprep.subr.mxu0 0.0
    %1282 = vmatpush1.msra.mxu0 %v1255
    %1283 = vmatprep.subr.mxu0 0.0
    %1284 = vmatpush1.msra.mxu0 %v1256
    %1285 = vmatprep.subr.mxu0 0.0
    %1286 = vmatpush1.msra.mxu0 %v1257
    %1287 = vmatprep.subr.mxu0 0.0
    %1288 = vmatpush1.msra.mxu0 %v1258
    %1289 = vmatprep.subr.mxu0 0.0
    %1290 = vmatpush1.msra.mxu0 %v1259
    %1291 = vmatprep.subr.mxu0 0.0
    %1292 = vmatpush1.msra.mxu0 %v1260
    %1293 = vmatprep.subr.mxu0 0.0
    %1294 = vmatpush1.msra.mxu0 %v1261
    %1295 = vmatprep.subr.mxu0 0.0
    %1296 = vmatpush1.msra.mxu0 %v1262
    %1297 = vmatprep.subr.mxu0 0.0
    %1298 = vmatpush1.msra.mxu0 %v1263
    %1299 = vmatprep.subr.mxu0 0.0
    %1300 = vmatpush1.msra.mxu0 %v1264
    %1301 = vmatprep.subr.mxu0 0.0
    %1302 = vmatpush1.msra.mxu0 %v1265
    %1303 = vmatprep.subr.mxu0 0.0
    %1304 = vmatpush1.msra.mxu0 %v1266
    %1305 = vmatprep.subr.mxu0 0.0
    %1306 = vmatpush1.msra.mxu0 %v1267
    %1307 = vmatprep.subr.mxu0 0.0
    %1308 = vmatpush1.msra.mxu0 0.0
    %1309 = vmatprep.subr.mxu0 0.0
    %1310 = vmatpush1.msra.mxu0 0.0
    %1311 = vmatprep.subr.mxu0 0.0
    %1312 = vmatpush1.msra.mxu0 0.0
    %1313 = vmatprep.subr.mxu0 0.0
    %1314 = vmatpush1.msra.mxu0 0.0
    %1315 = vmatprep.subr.mxu0 0.0
    %1316 = vmatpush1.msra.mxu0 0.0
    %1317 = vmatprep.subr.mxu0 0.0
    %1318 = vmatpush1.msra.mxu0 0.0
    %1319 = vmatprep.subr.mxu0 0.0
    %1320 = vmatpush1.msra.mxu0 0.0
    %1321 = vmatprep.subr.mxu0 0.0
    %1322 = vmatpush1.msra.mxu0 0.0
    %1323 = vmatprep.subr.mxu0 0.0
    %1324 = vmatpush1.msra.mxu0 0.0
    %1325 = vmatprep.subr.mxu0 0.0
    %1326 = vmatpush1.msra.mxu0 0.0
    %1327 = vmatprep.subr.mxu0 0.0
    %1328 = vmatpush1.msra.mxu0 0.0
    %1329 = vmatprep.subr.mxu0 0.0
    %1330 = vmatpush1.msra.mxu0 0.0
    %1331 = vmatprep.subr.mxu0 0.0
    %1332 = vmatpush1.msra.mxu0 0.0
    %1333 = vmatprep.subr.mxu0 0.0
    %1334 = vmatpush1.msra.mxu0 0.0
    %1335 = vmatprep.subr.mxu0 0.0
    %1336 = vmatpush1.msra.mxu0 0.0
    %1337 = vmatprep.subr.mxu0 0.0
    %1338 = vmatpush1.msra.mxu0 0.0
    %1339 = vmatprep.mubr.f32.mxu0 0.0
    %1340 = vmatmul.mubr.f32.gmra.mrb[0].mxu0 %v1062
    %v1341 = vpop.f32.mrb[0].mxu0
    %v1342 = vadd.f32 %v1273, %v1341
    %v1343 = vpop.f32.mrb[0].mxu0
    %1344 = vdwg.mxu0
    %v1345 = vmax.f32 %v1342, 0.0
    %v1346 = vld [vmem:[#allocation17] sm:$0xff]
    %v1347 = vld [vmem:[#allocation17 + $0x8] sm:$0xff]
    %v1348 = vld [vmem:[#allocation17 + $0x10] sm:$0xff]
    %v1349 = vld [vmem:[#allocation17 + $0x18] sm:$0xff]
    %v1350 = vld [vmem:[#allocation17 + $0x20] sm:$0xff]
    %v1351 = vld [vmem:[#allocation17 + $0x28] sm:$0xff]
    %v1352 = vld [vmem:[#allocation17 + $0x30] sm:$0xff]
    %v1353 = vld [vmem:[#allocation17 + $0x38] sm:$0xff]
    %v1354 = vld [vmem:[#allocation17 + $0x40] sm:$0xff]
    %v1355 = vld [vmem:[#allocation17 + $0x48] sm:$0xff]
    %v1356 = vld [vmem:[#allocation17 + $0x50] sm:$0xff]
    %v1357 = vld [vmem:[#allocation17 + $0x58] sm:$0xff]
    %v1358 = vld [vmem:[#allocation17 + $0x60] sm:$0xff]
    %v1359 = vld [vmem:[#allocation17 + $0x68] sm:$0xff]
    %v1360 = vld [vmem:[#allocation17 + $0x70] sm:$0xff]
    %v1361 = vld [vmem:[#allocation17 + $0x78] sm:$0xff]
    %v1362 = vld [vmem:[#allocation17 + $0x80] sm:$0xff]
    %v1363 = vld [vmem:[#allocation17 + $0x88] sm:$0xff]
    %v1364 = vld [vmem:[#allocation17 + $0x90] sm:$0xff]
    %v1365 = vld [vmem:[#allocation17 + $0x98] sm:$0xff]
    %v1366 = vld [vmem:[#allocation17 + $0xa0] sm:$0xff]
    %v1367 = vld [vmem:[#allocation17 + $0xa8] sm:$0xff]
    %v1368 = vld [vmem:[#allocation17 + $0xb0] sm:$0xff]
    %v1369 = vld [vmem:[#allocation17 + $0xb8] sm:$0xff]
    %v1370 = vld [vmem:[#allocation17 + $0xc0] sm:$0xff]
    %v1371 = vld [vmem:[#allocation17 + $0xc8] sm:$0xff]
    %v1372 = vld [vmem:[#allocation17 + $0xd0] sm:$0xff]
    %v1373 = vld [vmem:[#allocation17 + $0xd8] sm:$0xff]
    %v1374 = vld [vmem:[#allocation17 + $0xe0] sm:$0xff]
    %v1375 = vld [vmem:[#allocation17 + $0xe8] sm:$0xff]
    %v1376 = vld [vmem:[#allocation17 + $0xf0] sm:$0xff]
    %v1377 = vld [vmem:[#allocation17 + $0xf8] sm:$0xff]
    %v1378 = vld [vmem:[%s24] sm:$0x3]
    %v1380 = vlaneseq
    %v1381 = vshrl.u32 %v1380, 7
    %v1382 = vsub.s32 0, %v1381
    %v1383 = vrot.slane %v1378, %v1382
    %v1384 = vlaneseq
    %v1385 = vshrl.u32 %v1384, 7
    %v1386 = vsub.s32 1, %v1385
    %v1387 = vrot.slane %v1378, %v1386
    %1390 = vmatprep.subr.mxu0 %v1347
    %1391 = vmatpush1.msra.mxu0 %v1346
    %1392 = vmatprep.subr.mxu0 %v1349
    %1393 = vmatpush1.msra.mxu0 %v1348
    %1394 = vmatprep.subr.mxu0 %v1351
    %1395 = vmatpush1.msra.mxu0 %v1350
    %1396 = vmatprep.subr.mxu0 %v1353
    %1397 = vmatpush1.msra.mxu0 %v1352
    %1398 = vmatprep.subr.mxu0 %v1355
    %1399 = vmatpush1.msra.mxu0 %v1354
    %1400 = vmatprep.subr.mxu0 %v1357
    %1401 = vmatpush1.msra.mxu0 %v1356
    %1402 = vmatprep.subr.mxu0 %v1359
    %1403 = vmatpush1.msra.mxu0 %v1358
    %1404 = vmatprep.subr.mxu0 %v1361
    %1405 = vmatpush1.msra.mxu0 %v1360
    %1406 = vmatprep.subr.mxu0 %v1363
    %1407 = vmatpush1.msra.mxu0 %v1362
    %1408 = vmatprep.subr.mxu0 %v1365
    %1409 = vmatpush1.msra.mxu0 %v1364
    %1410 = vmatprep.subr.mxu0 %v1367
    %1411 = vmatpush1.msra.mxu0 %v1366
    %1412 = vmatprep.subr.mxu0 %v1369
    %1413 = vmatpush1.msra.mxu0 %v1368
    %1414 = vmatprep.subr.mxu0 %v1371
    %1415 = vmatpush1.msra.mxu0 %v1370
    %1416 = vmatprep.subr.mxu0 %v1373
    %1417 = vmatpush1.msra.mxu0 %v1372
    %1418 = vmatprep.subr.mxu0 %v1375
    %1419 = vmatpush1.msra.mxu0 %v1374
    %1420 = vmatprep.subr.mxu0 %v1377
    %1421 = vmatpush1.msra.mxu0 %v1376
    %1422 = vmatprep.subr.mxu0 0.0
    %1423 = vmatpush1.msra.mxu0 0.0
    %1424 = vmatprep.subr.mxu0 0.0
    %1425 = vmatpush1.msra.mxu0 0.0
    %1426 = vmatprep.subr.mxu0 0.0
    %1427 = vmatpush1.msra.mxu0 0.0
    %1428 = vmatprep.subr.mxu0 0.0
    %1429 = vmatpush1.msra.mxu0 0.0
    %1430 = vmatprep.subr.mxu0 0.0
    %1431 = vmatpush1.msra.mxu0 0.0
    %1432 = vmatprep.subr.mxu0 0.0
    %1433 = vmatpush1.msra.mxu0 0.0
    %1434 = vmatprep.subr.mxu0 0.0
    %1435 = vmatpush1.msra.mxu0 0.0
    %1436 = vmatprep.subr.mxu0 0.0
    %1437 = vmatpush1.msra.mxu0 0.0
    %1438 = vmatprep.subr.mxu0 0.0
    %1439 = vmatpush1.msra.mxu0 0.0
    %1440 = vmatprep.subr.mxu0 0.0
    %1441 = vmatpush1.msra.mxu0 0.0
    %1442 = vmatprep.subr.mxu0 0.0
    %1443 = vmatpush1.msra.mxu0 0.0
    %1444 = vmatprep.subr.mxu0 0.0
    %1445 = vmatpush1.msra.mxu0 0.0
    %1446 = vmatprep.subr.mxu0 0.0
    %1447 = vmatpush1.msra.mxu0 0.0
    %1448 = vmatprep.subr.mxu0 0.0
    %1449 = vmatpush1.msra.mxu0 0.0
    %1450 = vmatprep.subr.mxu0 0.0
    %1451 = vmatpush1.msra.mxu0 0.0
    %1452 = vmatprep.subr.mxu0 0.0
    %1453 = vmatpush1.msra.mxu0 0.0
    %1454 = vmatprep.mubr.f32.mxu0 0.0
    %1455 = vmatmul.mubr.f32.gmra.mrb[0].mxu0 %v1345
    %v1456 = vpop.f32.mrb[0].mxu0
    %v1457 = vadd.f32 %v1383, %v1456
    %v1458 = vpop.f32.mrb[0].mxu0
    %v1459 = vadd.f32 %v1387, %v1458
    %1460 = vdwg.mxu0
    %v1461 = vsub.f32 0.0, %v1459
    %v1462 = vmul.f32 %v1461, 1.442695
    %v1463 = vpow.pop %v1462
    %v1464 = vadd.f32 %v1463, 1.0
    %v1465 = vrcp.pop %v1464
    %v1466 = vmul.f32 1.0, %v1465
    %v1467 = vmul.f32 %v1466, 0.9
    %v1468 = vadd.f32 %v1467, 0.1
    %v1469 = vld [vmem:[%s1] sm:$0x3]
    %v1470 = vmul.f32 %v1468, %v1469
    %v1471 = vadd.f32 %v1457, %v1470
    %v1472 = vld [vmem:[#allocation19] sm:$0xff]
    %v1473 = vld [vmem:[#allocation19 + $0x8] sm:$0xff]
    %v1474 = vld [vmem:[#allocation19 + $0x10] sm:$0xff]
    %v1475 = vld [vmem:[#allocation19 + $0x18] sm:$0xff]
    %v1476 = vld [vmem:[#allocation19 + $0x20] sm:$0xff]
    %v1477 = vld [vmem:[#allocation19 + $0x28] sm:$0xff]
    %v1478 = vld [vmem:[#allocation19 + $0x30] sm:$0xff]
    %v1479 = vld [vmem:[#allocation19 + $0x38] sm:$0xff]
    %v1480 = vld [vmem:[#allocation19 + $0x40] sm:$0xff]
    %v1481 = vld [vmem:[#allocation19 + $0x48] sm:$0xff]
    %v1482 = vld [vmem:[#allocation19 + $0x50] sm:$0xff]
    %v1483 = vld [vmem:[#allocation19 + $0x58] sm:$0xff]
    %v1484 = vld [vmem:[#allocation19 + $0x60] sm:$0xff]
    %v1485 = vld [vmem:[#allocation19 + $0x68] sm:$0xff]
    %v1486 = vld [vmem:[#allocation19 + $0x70] sm:$0xff]
    %v1487 = vld [vmem:[#allocation19 + $0x78] sm:$0xff]
    %v1488 = vld [vmem:[#allocation20] sm:$0xff]
    %v1489 = vld [vmem:[#allocation20 + $0x8] sm:$0xff]
    %v1490 = vld [vmem:[#allocation20 + $0x10] sm:$0xff]
    %v1491 = vld [vmem:[#allocation20 + $0x18] sm:$0xff]
    %v1492 = vld [vmem:[#allocation20 + $0x20] sm:$0xff]
    %v1493 = vld [vmem:[#allocation20 + $0x28] sm:$0xff]
    %v1494 = vld [vmem:[#allocation20 + $0x30] sm:$0xff]
    %v1495 = vld [vmem:[#allocation20 + $0x38] sm:$0xff]
    %v1496 = vld [vmem:[#allocation20 + $0x40] sm:$0xff]
    %v1497 = vld [vmem:[#allocation20 + $0x48] sm:$0xff]
    %v1498 = vld [vmem:[#allocation20 + $0x50] sm:$0xff]
    %v1499 = vld [vmem:[#allocation20 + $0x58] sm:$0xff]
    %v1500 = vld [vmem:[#allocation20 + $0x60] sm:$0xff]
    %v1501 = vld [vmem:[#allocation20 + $0x68] sm:$0xff]
    %v1502 = vld [vmem:[#allocation20 + $0x70] sm:$0xff]
    %v1503 = vld [vmem:[#allocation20 + $0x78] sm:$0xff]
    %1504 = vmatprep.subr.mxu0 0.0
    %1505 = vmatpush1.msra.mxu0 %v1488
    %1506 = vmatprep.subr.mxu0 0.0
    %1507 = vmatpush1.msra.mxu0 %v1489
    %1508 = vmatprep.subr.mxu0 0.0
    %1509 = vmatpush1.msra.mxu0 %v1490
    %1510 = vmatprep.subr.mxu0 0.0
    %1511 = vmatpush1.msra.mxu0 %v1491
    %1512 = vmatprep.subr.mxu0 0.0
    %1513 = vmatpush1.msra.mxu0 %v1492
    %1514 = vmatprep.subr.mxu0 0.0
    %1515 = vmatpush1.msra.mxu0 %v1493
    %1516 = vmatprep.subr.mxu0 0.0
    %1517 = vmatpush1.msra.mxu0 %v1494
    %1518 = vmatprep.subr.mxu0 0.0
    %1519 = vmatpush1.msra.mxu0 %v1495
    %1520 = vmatprep.subr.mxu0 0.0
    %1521 = vmatpush1.msra.mxu0 %v1496
    %1522 = vmatprep.subr.mxu0 0.0
    %1523 = vmatpush1.msra.mxu0 %v1497
    %1524 = vmatprep.subr.mxu0 0.0
    %1525 = vmatpush1.msra.mxu0 %v1498
    %1526 = vmatprep.subr.mxu0 0.0
    %1527 = vmatpush1.msra.mxu0 %v1499
    %1528 = vmatprep.subr.mxu0 0.0
    %1529 = vmatpush1.msra.mxu0 %v1500
    %1530 = vmatprep.subr.mxu0 0.0
    %1531 = vmatpush1.msra.mxu0 %v1501
    %1532 = vmatprep.subr.mxu0 0.0
    %1533 = vmatpush1.msra.mxu0 %v1502
    %1534 = vmatprep.subr.mxu0 0.0
    %1535 = vmatpush1.msra.mxu0 %v1503
    %1536 = vmatprep.subr.mxu0 0.0
    %1537 = vmatpush1.msra.mxu0 0.0
    %1538 = vmatprep.subr.mxu0 0.0
    %1539 = vmatpush1.msra.mxu0 0.0
    %1540 = vmatprep.subr.mxu0 0.0
    %1541 = vmatpush1.msra.mxu0 0.0
    %1542 = vmatprep.subr.mxu0 0.0
    %1543 = vmatpush1.msra.mxu0 0.0
    %1544 = vmatprep.subr.mxu0 0.0
    %1545 = vmatpush1.msra.mxu0 0.0
    %1546 = vmatprep.subr.mxu0 0.0
    %1547 = vmatpush1.msra.mxu0 0.0
    %1548 = vmatprep.subr.mxu0 0.0
    %1549 = vmatpush1.msra.mxu0 0.0
    %1550 = vmatprep.subr.mxu0 0.0
    %1551 = vmatpush1.msra.mxu0 0.0
    %1552 = vmatprep.subr.mxu0 0.0
    %1553 = vmatpush1.msra.mxu0 0.0
    %1554 = vmatprep.subr.mxu0 0.0
    %1555 = vmatpush1.msra.mxu0 0.0
    %1556 = vmatprep.subr.mxu0 0.0
    %1557 = vmatpush1.msra.mxu0 0.0
    %1558 = vmatprep.subr.mxu0 0.0
    %1559 = vmatpush1.msra.mxu0 0.0
    %1560 = vmatprep.subr.mxu0 0.0
    %1561 = vmatpush1.msra.mxu0 0.0
    %1562 = vmatprep.subr.mxu0 0.0
    %1563 = vmatpush1.msra.mxu0 0.0
    %1564 = vmatprep.subr.mxu0 0.0
    %1565 = vmatpush1.msra.mxu0 0.0
    %1566 = vmatprep.subr.mxu0 0.0
    %1567 = vmatpush1.msra.mxu0 0.0
    %1568 = vmatprep.mubr.f32.mxu0 0.0
    %1569 = vmatmul.mubr.f32.gmra.mrb[0].mxu0 %v1471
    %v1570 = vpop.f32.mrb[0].mxu0
    %v1571 = vadd.f32 0.0, %v1570
    %v1572 = vpop.f32.mrb[0].mxu0
    %1573 = vdwg.mxu0
    %1574 = vmatprep.subr.mxu0 0.0
    %1575 = vmatpush1.msra.mxu0 %v1472
    %1576 = vmatprep.subr.mxu0 0.0
    %1577 = vmatpush1.msra.mxu0 %v1473
    %1578 = vmatprep.subr.mxu0 0.0
    %1579 = vmatpush1.msra.mxu0 %v1474
    %1580 = vmatprep.subr.mxu0 0.0
    %1581 = vmatpush1.msra.mxu0 %v1475
    %1582 = vmatprep.subr.mxu0 0.0
    %1583 = vmatpush1.msra.mxu0 %v1476
    %1584 = vmatprep.subr.mxu0 0.0
    %1585 = vmatpush1.msra.mxu0 %v1477
    %1586 = vmatprep.subr.mxu0 0.0
    %1587 = vmatpush1.msra.mxu0 %v1478
    %1588 = vmatprep.subr.mxu0 0.0
    %1589 = vmatpush1.msra.mxu0 %v1479
    %1590 = vmatprep.subr.mxu0 0.0
    %1591 = vmatpush1.msra.mxu0 %v1480
    %1592 = vmatprep.subr.mxu0 0.0
    %1593 = vmatpush1.msra.mxu0 %v1481
    %1594 = vmatprep.subr.mxu0 0.0
    %1595 = vmatpush1.msra.mxu0 %v1482
    %1596 = vmatprep.subr.mxu0 0.0
    %1597 = vmatpush1.msra.mxu0 %v1483
    %1598 = vmatprep.subr.mxu0 0.0
    %1599 = vmatpush1.msra.mxu0 %v1484
    %1600 = vmatprep.subr.mxu0 0.0
    %1601 = vmatpush1.msra.mxu0 %v1485
    %1602 = vmatprep.subr.mxu0 0.0
    %1603 = vmatpush1.msra.mxu0 %v1486
    %1604 = vmatprep.subr.mxu0 0.0
    %1605 = vmatpush1.msra.mxu0 %v1487
    %1606 = vmatprep.subr.mxu0 0.0
    %1607 = vmatpush1.msra.mxu0 0.0
    %1608 = vmatprep.subr.mxu0 0.0
    %1609 = vmatpush1.msra.mxu0 0.0
    %1610 = vmatprep.subr.mxu0 0.0
    %1611 = vmatpush1.msra.mxu0 0.0
    %1612 = vmatprep.subr.mxu0 0.0
    %1613 = vmatpush1.msra.mxu0 0.0
    %1614 = vmatprep.subr.mxu0 0.0
    %1615 = vmatpush1.msra.mxu0 0.0
    %1616 = vmatprep.subr.mxu0 0.0
    %1617 = vmatpush1.msra.mxu0 0.0
    %1618 = vmatprep.subr.mxu0 0.0
    %1619 = vmatpush1.msra.mxu0 0.0
    %1620 = vmatprep.subr.mxu0 0.0
    %1621 = vmatpush1.msra.mxu0 0.0
    %1622 = vmatprep.subr.mxu0 0.0
    %1623 = vmatpush1.msra.mxu0 0.0
    %1624 = vmatprep.subr.mxu0 0.0
    %1625 = vmatpush1.msra.mxu0 0.0
    %1626 = vmatprep.subr.mxu0 0.0
    %1627 = vmatpush1.msra.mxu0 0.0
    %1628 = vmatprep.subr.mxu0 0.0
    %1629 = vmatpush1.msra.mxu0 0.0
    %1630 = vmatprep.subr.mxu0 0.0
    %1631 = vmatpush1.msra.mxu0 0.0
    %1632 = vmatprep.subr.mxu0 0.0
    %1633 = vmatpush1.msra.mxu0 0.0
    %1634 = vmatprep.subr.mxu0 0.0
    %1635 = vmatpush1.msra.mxu0 0.0
    %1636 = vmatprep.subr.mxu0 0.0
    %1637 = vmatpush1.msra.mxu0 0.0
    %1638 = vmatprep.mubr.f32.mxu0 0.0
    %1639 = vmatmul.mubr.f32.gmra.mrb[0].mxu0 %v1249
    %v1640 = vpop.f32.mrb[0].mxu0
    %v1641 = vadd.f32 %v1571, %v1640
    %v1642 = vpop.f32.mrb[0].mxu0
    %1643 = vdwg.mxu0
    %v1644 = vld [vmem:[%s27] sm:$0x1]
    %v1646 = vlaneseq
    %v1647 = vshrl.u32 %v1646, 7
    %v1648 = vsub.s32 0, %v1647
    %v1649 = vrot.slane %v1644, %v1648
    %v1651 = vadd.f32 %v1641, %v1649
    %1652 = vst [vmem:[#allocation22] sm:$0x3] %v1651
    // Predicated region
    $region162: #{tpu_custom_call.1} parent=1 // pred_check
      _
    $region163: #{tpu_custom_call.1} parent=1 // pred_check_branch
      %1654 = sbr.rel (0) target = $region165
    $region164: #{tpu_custom_call.1} parent=1 // pred_region
      %s1656 = ssub.s32 32, 32
      %1657 = vsyncadd [#allocation4], %s1656
      %s1659 = sshll.u32 [#allocation22], 4
      %s1660 = int_to_ptr.vmem [resolvable:$true] %s1659
      %1662 = dma.vmem_to_hbm [thread:$0]  %s1660, 32, %s28, [#allocation4]
    $region165: #{tpu_custom_call.1} parent=1 // pred_fallthru
      _
    // Predicated region
    $region166: #{tpu_custom_call.1} parent=1 // pred_check
      _
    $region167: #{tpu_custom_call.1} parent=1 // pred_check_branch
      %1664 = sbr.rel (0) target = $region169
    $region168: #{tpu_custom_call.1} parent=1 // pred_region
      %1665 = dma.done [#allocation4], 32
    $region169: #{tpu_custom_call.1} parent=1 // pred_fallthru
      _
    %1666 = vsyncpa [#allocation3], 1
    %1667 = vsyncpa [#allocation6], 1
    %1668 = vsyncpa [#allocation9], 1
    %1669 = vsyncpa [#allocation12], 1
    %1670 = vsyncpa [#allocation15], 1
    %1671 = vsyncpa [#allocation18], 1
    %1672 = vsyncpa [#allocation21], 1
    %1673 = vsyncpa [#allocation4], 1

</llo_original>
